<compile_context>
chip_gen: v6e
topology: v6e:2x2x1
jax: 0.10.0
libtpu: 0.0.40
codegen_flags: <defaults>
</compile_context>

<pallas_src>
import functools

import jax
import jax.numpy as jnp
from jax.experimental import pallas as pl
from jax.experimental.pallas import tpu as pltpu


def _lie_kernel(x_ref, dww_ref, p8_ref, p32_ref, o_ref, *,
                shifts, HW, BtC, BtHd, eps):
    # Per-grid-step refs (Bt batch elements packed along the sublane axis):
    #   x_ref   : (BtC, HW)            input, lane-dense on H*W
    #   dww_ref : (KK, BtC, HW)        depthwise tap weights, edge-masked and
    #                                  pre-broadcast to full lane width
    #   p8_ref  : (BtC, BtHd+BtC+2)    [ W2_blk | seg_mean | dw_b | b2 ]
    #   p32_ref : (BtHd, BtC+1)        [ W1_blk (gamma folded) | b1' ]
    #   o_ref   : (BtC, HW)
    x = x_ref[...].astype(jnp.float32)                      # (BtC, HW)

    # --- depthwise kxk conv: lane rolls (XLU) + pre-masked tap weights ---
    # Zero padding is realised by the zeroed boundary weights, which cancel the
    # roll wrap-around; no masks / iota / compares in-kernel.
    acc = jnp.zeros_like(x)
    for t, d in enumerate(shifts):
        tap = x if d == 0 else pltpu.roll(x, shift=(-d) % HW, axis=1)
        acc = acc + tap * dww_ref[t]
    dwb = p8_ref[:, BtHd + BtC:BtHd + BtC + 1]              # (BtC, 1)
    y = acc + dwb

    # --- LayerNorm over channels (per packed batch element) ---
    # Segmented channel mean via a tiny block-diagonal averaging matmul (MXU,
    # free slot); two-pass variance for numerical robustness.
    seg = p8_ref[:, BtHd:BtHd + BtC]                        # (BtC, BtC)
    mean = jnp.dot(seg, y, preferred_element_type=jnp.float32,
                   precision=jax.lax.Precision.HIGHEST)
    yc = y - mean
    var = jnp.dot(seg, yc * yc, preferred_element_type=jnp.float32,
                  precision=jax.lax.Precision.HIGHEST)
    yn = yc * jax.lax.rsqrt(var + eps)       # gamma/beta folded into pwconv1

    # --- pwconv1 (C -> Hd, block-diagonal over batch) + ReLU : MXU ---
    w1 = p32_ref[:, :BtC]                                   # (BtHd, BtC)
    b1 = p32_ref[:, BtC:BtC + 1]                            # (BtHd, 1)
    h = jnp.dot(w1, yn, preferred_element_type=jnp.float32,
                precision=jax.lax.Precision.HIGHEST) + b1
    h = jnp.maximum(h, 0.0)

    # --- pwconv2 (Hd -> C, block-diagonal over batch) : MXU ---
    w2 = p8_ref[:, :BtHd]                                   # (BtC, BtHd)
    b2 = p8_ref[:, BtHd + BtC + 1:BtHd + BtC + 2]           # (BtC, 1)
    z = jnp.dot(w2, h, preferred_element_type=jnp.float32,
                precision=jax.lax.Precision.HIGHEST) + b2

    # --- residual add (DropPath(0.0) is identity); dense full-width store ---
    o_ref[...] = (x + z).astype(o_ref.dtype)


def _pick_batch_tile(B, C):
    """Largest Bt dividing B with Bt*C a multiple of 8 (dense sublanes), capped."""
    cap = max(1, min(B, 64 // max(C, 1)))
    for bt in range(cap, 0, -1):
        if B % bt == 0 and (bt * C) % 8 == 0:
            return bt
    return B   # fallback: single full-array block (sublane-padded but correct)


def local_interaction_enhancer(x_nchw, params, *, kernel_size=3, eps=1e-5):
    """x_nchw: [B, C, H, W] float32. Returns [B, C, H, W]."""
    B, C, H, W = x_nchw.shape
    HW = H * W
    Hd = params["w1"].shape[0]
    KK = kernel_size * kernel_size
    pad = kernel_size // 2

    Bt = _pick_batch_tile(B, C)
    num_tiles = B // Bt
    BtC, BtHd = Bt * C, Bt * Hd

    # Free contiguous reshape: NCHW -> (B*C, H*W), batch packed along sublanes.
    x_flat = x_nchw.reshape(B * C, HW)

    # --- fold zero-padding edge masks into pre-broadcast depthwise weights ---
    row = jnp.arange(HW, dtype=jnp.int32) // W
    col = jnp.arange(HW, dtype=jnp.int32) % W
    masks, shifts = [], []
    for ki in range(kernel_size):
        for kj in range(kernel_size):
            dh, dw = ki - pad, kj - pad
            shifts.append(dh * W + dw)
            valid = jnp.ones((HW,), jnp.bool_)
            if dh < 0:
                valid = valid & (row >= -dh)
            if dh > 0:
                valid = valid & (row < H - dh)
            if dw < 0:
                valid = valid & (col >= -dw)
            if dw > 0:
                valid = valid & (col < W - dw)
            masks.append(valid)
    mask = jnp.stack(masks).astype(jnp.float32)                     # (KK, HW)
    dwk = jnp.tile(params["dw_w"].reshape(C, KK), (Bt, 1))          # (BtC, KK)
    dw_full = (dwk.T[:, :, None] * mask[:, None, :]).astype(jnp.float32)  # (KK,BtC,HW)

    # --- fold LN affine into pwconv1; block-diagonalize pointwise convs ---
    eye_bt = jnp.eye(Bt, dtype=jnp.float32)
    w1g = params["w1"] * params["ln_g"][None, :]                    # (Hd, C)
    b1f = params["b1"] + params["w1"] @ params["ln_b"]              # (Hd,)
    w1_blk = jnp.kron(eye_bt, w1g)                                  # (BtHd, BtC)
    w2_blk = jnp.kron(eye_bt, params["w2"])                         # (BtC, BtHd)
    seg = jnp.kron(eye_bt, jnp.full((C, C), 1.0 / C, jnp.float32))  # (BtC, BtC)
    dwb_col = jnp.tile(params["dw_b"], Bt).reshape(BtC, 1)
    b1_col = jnp.tile(b1f, Bt).reshape(BtHd, 1)
    b2_col = jnp.tile(params["b2"], Bt).reshape(BtC, 1)

    # Pack the small params into two streams (fewer pipeline streams / DMAs):
    #   p8  = [ W2_blk | seg | dw_b | b2 ]     (BtC,  BtHd + BtC + 2)
    #   p32 = [ W1_blk | b1' ]                 (BtHd, BtC + 1)
    p8 = jnp.concatenate([w2_blk, seg, dwb_col, b2_col], axis=1).astype(jnp.float32)
    p32 = jnp.concatenate([w1_blk, b1_col], axis=1).astype(jnp.float32)

    kernel = functools.partial(_lie_kernel, shifts=tuple(shifts),
                               HW=HW, BtC=BtC, BtHd=BtHd, eps=eps)

    if num_tiles > 1:
        # v7x: shard batch tiles across both TensorCores.
        dim_sem = (pltpu.CORE_PARALLEL,)
    else:
        dim_sem = (pltpu.ARBITRARY,)

    out_flat = pl.pallas_call(
        kernel,
        out_shape=jax.ShapeDtypeStruct((B * C, HW), x_nchw.dtype),
        grid=(num_tiles,),
        in_specs=[
            pl.BlockSpec((BtC, HW), lambda i: (i, 0)),
            pl.BlockSpec((KK, BtC, HW), lambda i: (0, 0, 0)),
            pl.BlockSpec((BtC, BtHd + BtC + 2), lambda i: (0, 0)),
            pl.BlockSpec((BtHd, BtC + 1), lambda i: (0, 0)),
        ],
        out_specs=pl.BlockSpec((BtC, HW), lambda i: (i, 0)),
        compiler_params=pltpu.CompilerParams(
            dimension_semantics=dim_sem,
            vmem_limit_bytes=16 * 1024 * 1024,   # footprint here is a few hundred KiB
        ),
    )(x_flat, dw_full, p8, p32)

    return out_flat.reshape(B, C, H, W)


def _reference(x_nchw, params, *, kernel_size=3, eps=1e-5):
    """Pure-JAX NCHW reference (standard padded-slice conv) for validation."""
    B, C, H, W = x_nchw.shape
    pad = kernel_size // 2
    xp = jnp.pad(x_nchw, ((0, 0), (0, 0), (pad, pad), (pad, pad)))
    dw = params["dw_w"].reshape(C, kernel_size, kernel_size)
    y = jnp.zeros_like(x_nchw)
    for ki in range(kernel_size):
        for kj in range(kernel_size):
            y = y + xp[:, :, ki:ki + H, kj:kj + W] * dw[:, ki, kj][None, :, None, None]
    y = y + params["dw_b"][None, :, None, None]
    mean = jnp.mean(y, axis=1, keepdims=True)
    var = jnp.mean((y - mean) ** 2, axis=1, keepdims=True)
    y = (y - mean) * jax.lax.rsqrt(var + eps)
    y = y * params["ln_g"][None, :, None, None] + params["ln_b"][None, :, None, None]
    h = jnp.einsum("bchw,dc->bdhw", y, params["w1"]) + params["b1"][None, :, None, None]
    h = jnp.maximum(h, 0.0)
    z = jnp.einsum("bdhw,cd->bchw", h, params["w2"]) + params["b2"][None, :, None, None]
    return x_nchw + z


def init_params(key, dim, kernel_size=3, expansion_ratio=4.0):
    hidden = int(dim * expansion_ratio)
    ks = jax.random.split(key, 6)
    # Layout notes (vs PyTorch):
    #   dwconv.weight  [dim,1,k,k]      -> dw_w [dim, k*k]
    #   pwconv1.weight [hidden,dim,1,1] -> w1   [hidden, dim]
    #   pwconv2.weight [dim,hidden,1,1] -> w2   [dim, hidden]
    return {
        "dw_w": 0.1 * jax.random.normal(ks[0], (dim, kernel_size * kernel_size), jnp.float32),
        "dw_b": 0.1 * jax.random.normal(ks[1], (dim,), jnp.float32),
        "ln_g": jnp.ones((dim,), jnp.float32),
        "ln_b": jnp.zeros((dim,), jnp.float32),
        "w1": 0.1 * jax.random.normal(ks[2], (hidden, dim), jnp.float32),
        "b1": 0.1 * jax.random.normal(ks[3], (hidden,), jnp.float32),
        "w2": 0.1 * jax.random.normal(ks[4], (dim, hidden), jnp.float32),
        "b2": 0.1 * jax.random.normal(ks[5], (dim,), jnp.float32),
    }


if __name__ == "__main__":
    B, C, H, W = 2, 4, 16, 16  # matches PyTorch NCHW input [2, 4, 16, 16]
    key = jax.random.PRNGKey(0)
    kx, kp = jax.random.split(key)

    x_nchw = jax.random.normal(kx, (B, C, H, W), jnp.float32)
    params = init_params(kp, C, kernel_size=3, expansion_ratio=4.0)

    out = local_interaction_enhancer(x_nchw, params)
    jax.block_until_ready(out)

    ref = _reference(x_nchw, params)
    assert out.shape == (B, C, H, W)
    err = float(jnp.max(jnp.abs(out - ref)))
    # Tolerance allows for MXU accumulation-order differences (f32 path).
    assert err < 1e-3, f"mismatch vs reference: {err}"

    print("KERNEL_OK")
</pallas_src>

<mosaic_0001>
module attributes {stable_mosaic.version = 11 : i64} {
  func.func @_lie_kernel(%arg0: i32, %arg1: memref<8x256xf32, #tpu.memory_space<vmem>>, %arg2: memref<9x8x256xf32, #tpu.memory_space<vmem>>, %arg3: memref<8x42xf32, #tpu.memory_space<vmem>>, %arg4: memref<32x9xf32, #tpu.memory_space<vmem>>, %arg5: memref<8x256xf32, #tpu.memory_space<vmem>>) attributes {dimension_semantics = [#tpu.dimension_semantics<arbitrary>], iteration_bounds = array<i64: 1>, scalar_prefetch = 0 : i64, scratch_operands = 0 : i64, tpu.core_type = #tpu.core_type<tc>, window_params = [{transform_indices = @transform_0, window_bounds = array<i64: 8, 256>}, {pipeline_mode = #tpu.pipeline_mode<synchronous>, transform_indices = @transform_1, window_bounds = array<i64: 9, 8, 256>}, {pipeline_mode = #tpu.pipeline_mode<synchronous>, transform_indices = @transform_2, window_bounds = array<i64: 8, 42>}, {pipeline_mode = #tpu.pipeline_mode<synchronous>, transform_indices = @transform_3, window_bounds = array<i64: 32, 9>}, {transform_indices = @transform_4, window_bounds = array<i64: 8, 256>}]} {
    %c0 = arith.constant 0 : index
    %c0_0 = arith.constant 0 : index
    %0 = vector.load %arg1[%c0, %c0_0] : memref<8x256xf32, #tpu.memory_space<vmem>>, vector<8x256xf32>
    %cst = arith.constant 0.000000e+00 : f32
    %1 = vector.broadcast %cst : f32 to vector<8x256xf32>
    %c17_i32 = arith.constant 17 : i32
    %2 = tpu.dynamic_rotate %0 by %c17_i32 dim 1 : vector<8x256xf32>, i32 -> vector<8x256xf32>
    %c0_1 = arith.constant 0 : index
    %c0_2 = arith.constant 0 : index
    %c0_3 = arith.constant 0 : index
    %3 = vector.load %arg2[%c0_1, %c0_2, %c0_3] : memref<9x8x256xf32, #tpu.memory_space<vmem>>, vector<1x8x256xf32>
    %4 = vector.shape_cast %3 : vector<1x8x256xf32> to vector<8x256xf32>
    %5 = arith.mulf %2, %4 : vector<8x256xf32>
    %6 = arith.addf %1, %5 : vector<8x256xf32>
    %c16_i32 = arith.constant 16 : i32
    %7 = tpu.dynamic_rotate %0 by %c16_i32 dim 1 : vector<8x256xf32>, i32 -> vector<8x256xf32>
    %c1 = arith.constant 1 : index
    %c0_4 = arith.constant 0 : index
    %c0_5 = arith.constant 0 : index
    %8 = vector.load %arg2[%c1, %c0_4, %c0_5] : memref<9x8x256xf32, #tpu.memory_space<vmem>>, vector<1x8x256xf32>
    %9 = vector.shape_cast %8 : vector<1x8x256xf32> to vector<8x256xf32>
    %10 = arith.mulf %7, %9 : vector<8x256xf32>
    %11 = arith.addf %6, %10 : vector<8x256xf32>
    %c15_i32 = arith.constant 15 : i32
    %12 = tpu.dynamic_rotate %0 by %c15_i32 dim 1 : vector<8x256xf32>, i32 -> vector<8x256xf32>
    %c2 = arith.constant 2 : index
    %c0_6 = arith.constant 0 : index
    %c0_7 = arith.constant 0 : index
    %13 = vector.load %arg2[%c2, %c0_6, %c0_7] : memref<9x8x256xf32, #tpu.memory_space<vmem>>, vector<1x8x256xf32>
    %14 = vector.shape_cast %13 : vector<1x8x256xf32> to vector<8x256xf32>
    %15 = arith.mulf %12, %14 : vector<8x256xf32>
    %16 = arith.addf %11, %15 : vector<8x256xf32>
    %c1_i32 = arith.constant 1 : i32
    %17 = tpu.dynamic_rotate %0 by %c1_i32 dim 1 : vector<8x256xf32>, i32 -> vector<8x256xf32>
    %c3 = arith.constant 3 : index
    %c0_8 = arith.constant 0 : index
    %c0_9 = arith.constant 0 : index
    %18 = vector.load %arg2[%c3, %c0_8, %c0_9] : memref<9x8x256xf32, #tpu.memory_space<vmem>>, vector<1x8x256xf32>
    %19 = vector.shape_cast %18 : vector<1x8x256xf32> to vector<8x256xf32>
    %20 = arith.mulf %17, %19 : vector<8x256xf32>
    %21 = arith.addf %16, %20 : vector<8x256xf32>
    %c4 = arith.constant 4 : index
    %c0_10 = arith.constant 0 : index
    %c0_11 = arith.constant 0 : index
    %22 = vector.load %arg2[%c4, %c0_10, %c0_11] : memref<9x8x256xf32, #tpu.memory_space<vmem>>, vector<1x8x256xf32>
    %23 = vector.shape_cast %22 : vector<1x8x256xf32> to vector<8x256xf32>
    %24 = arith.mulf %0, %23 : vector<8x256xf32>
    %25 = arith.addf %21, %24 : vector<8x256xf32>
    %c255_i32 = arith.constant 255 : i32
    %26 = tpu.dynamic_rotate %0 by %c255_i32 dim 1 : vector<8x256xf32>, i32 -> vector<8x256xf32>
    %c5 = arith.constant 5 : index
    %c0_12 = arith.constant 0 : index
    %c0_13 = arith.constant 0 : index
    %27 = vector.load %arg2[%c5, %c0_12, %c0_13] : memref<9x8x256xf32, #tpu.memory_space<vmem>>, vector<1x8x256xf32>
    %28 = vector.shape_cast %27 : vector<1x8x256xf32> to vector<8x256xf32>
    %29 = arith.mulf %26, %28 : vector<8x256xf32>
    %30 = arith.addf %25, %29 : vector<8x256xf32>
    %c241_i32 = arith.constant 241 : i32
    %31 = tpu.dynamic_rotate %0 by %c241_i32 dim 1 : vector<8x256xf32>, i32 -> vector<8x256xf32>
    %c6 = arith.constant 6 : index
    %c0_14 = arith.constant 0 : index
    %c0_15 = arith.constant 0 : index
    %32 = vector.load %arg2[%c6, %c0_14, %c0_15] : memref<9x8x256xf32, #tpu.memory_space<vmem>>, vector<1x8x256xf32>
    %33 = vector.shape_cast %32 : vector<1x8x256xf32> to vector<8x256xf32>
    %34 = arith.mulf %31, %33 : vector<8x256xf32>
    %35 = arith.addf %30, %34 : vector<8x256xf32>
    %c240_i32 = arith.constant 240 : i32
    %36 = tpu.dynamic_rotate %0 by %c240_i32 dim 1 : vector<8x256xf32>, i32 -> vector<8x256xf32>
    %c7 = arith.constant 7 : index
    %c0_16 = arith.constant 0 : index
    %c0_17 = arith.constant 0 : index
    %37 = vector.load %arg2[%c7, %c0_16, %c0_17] : memref<9x8x256xf32, #tpu.memory_space<vmem>>, vector<1x8x256xf32>
    %38 = vector.shape_cast %37 : vector<1x8x256xf32> to vector<8x256xf32>
    %39 = arith.mulf %36, %38 : vector<8x256xf32>
    %40 = arith.addf %35, %39 : vector<8x256xf32>
    %c239_i32 = arith.constant 239 : i32
    %41 = tpu.dynamic_rotate %0 by %c239_i32 dim 1 : vector<8x256xf32>, i32 -> vector<8x256xf32>
    %c8 = arith.constant 8 : index
    %c0_18 = arith.constant 0 : index
    %c0_19 = arith.constant 0 : index
    %42 = vector.load %arg2[%c8, %c0_18, %c0_19] : memref<9x8x256xf32, #tpu.memory_space<vmem>>, vector<1x8x256xf32>
    %43 = vector.shape_cast %42 : vector<1x8x256xf32> to vector<8x256xf32>
    %44 = arith.mulf %41, %43 : vector<8x256xf32>
    %45 = arith.addf %40, %44 : vector<8x256xf32>
    %c0_20 = arith.constant 0 : index
    %c40 = arith.constant 40 : index
    %46 = vector.load %arg3[%c0_20, %c40] : memref<8x42xf32, #tpu.memory_space<vmem>>, vector<8x1xf32>
    %47 = vector.broadcast %46 : vector<8x1xf32> to vector<8x256xf32>
    %48 = arith.addf %45, %47 : vector<8x256xf32>
    %c0_21 = arith.constant 0 : index
    %c32 = arith.constant 32 : index
    %49 = vector.load %arg3[%c0_21, %c32] : memref<8x42xf32, #tpu.memory_space<vmem>>, vector<8x8xf32>
    %cst_22 = arith.constant dense<0.000000e+00> : vector<8x256xf32>
    %50 = tpu.matmul %49, %48, %cst_22 {dimension_numbers = #tpu.dot_dimension_numbers<[1], [0], [0], [1], [0, 0, 1, 1], [], []>, precision = #tpu.contract_precision<fp32>} : vector<8x8xf32>, vector<8x256xf32>, vector<8x256xf32> -> vector<8x256xf32>
    %51 = arith.subf %48, %50 : vector<8x256xf32>
    %52 = arith.mulf %51, %51 : vector<8x256xf32>
    %cst_23 = arith.constant dense<0.000000e+00> : vector<8x256xf32>
    %53 = tpu.matmul %49, %52, %cst_23 {dimension_numbers = #tpu.dot_dimension_numbers<[1], [0], [0], [1], [0, 0, 1, 1], [], []>, precision = #tpu.contract_precision<fp32>} : vector<8x8xf32>, vector<8x256xf32>, vector<8x256xf32> -> vector<8x256xf32>
    %cst_24 = arith.constant 9.99999974E-6 : f32
    %54 = vector.broadcast %cst_24 : f32 to vector<8x256xf32>
    %55 = arith.addf %53, %54 : vector<8x256xf32>
    %56 = math.rsqrt %55 : vector<8x256xf32>
    %57 = arith.mulf %51, %56 : vector<8x256xf32>
    %c0_25 = arith.constant 0 : index
    %c0_26 = arith.constant 0 : index
    %58 = vector.load %arg4[%c0_25, %c0_26] : memref<32x9xf32, #tpu.memory_space<vmem>>, vector<32x8xf32>
    %c0_27 = arith.constant 0 : index
    %c8_28 = arith.constant 8 : index
    %59 = vector.load %arg4[%c0_27, %c8_28] : memref<32x9xf32, #tpu.memory_space<vmem>>, vector<32x1xf32>
    %cst_29 = arith.constant dense<0.000000e+00> : vector<32x256xf32>
    %60 = tpu.matmul %58, %57, %cst_29 {dimension_numbers = #tpu.dot_dimension_numbers<[1], [0], [0], [1], [0, 0, 1, 1], [], []>, precision = #tpu.contract_precision<fp32>} : vector<32x8xf32>, vector<8x256xf32>, vector<32x256xf32> -> vector<32x256xf32>
    %61 = vector.broadcast %59 : vector<32x1xf32> to vector<32x256xf32>
    %62 = arith.addf %60, %61 : vector<32x256xf32>
    %cst_30 = arith.constant 0.000000e+00 : f32
    %63 = vector.broadcast %cst_30 : f32 to vector<32x256xf32>
    %64 = arith.maximumf %62, %63 : vector<32x256xf32>
    %c0_31 = arith.constant 0 : index
    %c0_32 = arith.constant 0 : index
    %65 = vector.load %arg3[%c0_31, %c0_32] : memref<8x42xf32, #tpu.memory_space<vmem>>, vector<8x32xf32>
    %c0_33 = arith.constant 0 : index
    %c41 = arith.constant 41 : index
    %66 = vector.load %arg3[%c0_33, %c41] : memref<8x42xf32, #tpu.memory_space<vmem>>, vector<8x1xf32>
    %cst_34 = arith.constant dense<0.000000e+00> : vector<8x256xf32>
    %67 = tpu.matmul %65, %64, %cst_34 {dimension_numbers = #tpu.dot_dimension_numbers<[1], [0], [0], [1], [0, 0, 1, 1], [], []>, precision = #tpu.contract_precision<fp32>} : vector<8x32xf32>, vector<32x256xf32>, vector<8x256xf32> -> vector<8x256xf32>
    %68 = vector.broadcast %66 : vector<8x1xf32> to vector<8x256xf32>
    %69 = arith.addf %67, %68 : vector<8x256xf32>
    %70 = arith.addf %0, %69 : vector<8x256xf32>
    %c0_35 = arith.constant 0 : index
    %c0_36 = arith.constant 0 : index
    %71 = vector.load %arg5[%c0_35, %c0_36] : memref<8x256xf32, #tpu.memory_space<vmem>>, vector<8x256xf32>
    tpu.vector_store %arg5[%c0_35, %c0_36], %70 {strides = array<i32>} : memref<8x256xf32, #tpu.memory_space<vmem>>, vector<8x256xf32>,
    return
  }
  func.func @transform_0(%arg0: i32) -> (i32, i32) {
    %c0_i32 = arith.constant 0 : i32
    %c0_i32_0 = arith.constant 0 : i32
    return %arg0, %c0_i32 : i32, i32
  }
  func.func @transform_1(%arg0: i32) -> (i32, i32, i32) {
    %c0_i32 = arith.constant 0 : i32
    %c0_i32_0 = arith.constant 0 : i32
    %c0_i32_1 = arith.constant 0 : i32
    %c0_i32_2 = arith.constant 0 : i32
    return %c0_i32, %c0_i32_0, %c0_i32_1 : i32, i32, i32
  }
  func.func @transform_2(%arg0: i32) -> (i32, i32) {
    %c0_i32 = arith.constant 0 : i32
    %c0_i32_0 = arith.constant 0 : i32
    %c0_i32_1 = arith.constant 0 : i32
    return %c0_i32, %c0_i32_0 : i32, i32
  }
  func.func @transform_3(%arg0: i32) -> (i32, i32) {
    %c0_i32 = arith.constant 0 : i32
    %c0_i32_0 = arith.constant 0 : i32
    %c0_i32_1 = arith.constant 0 : i32
    return %c0_i32, %c0_i32_0 : i32, i32
  }
  func.func @transform_4(%arg0: i32) -> (i32, i32) {
    %c0_i32 = arith.constant 0 : i32
    %c0_i32_0 = arith.constant 0 : i32
    return %arg0, %c0_i32 : i32, i32
  }
}

</mosaic_0001>

<llo_original>
// kernel: tpu_custom_call.1
$region0: #{tpu_custom_call.1}
  #allocation0 [shape = 'u32[]', space=smem, size = 0x4, offset = 0x4, fixed_abs, tag = 'smem constant byte address 0x4 - core index']
  #allocation1 [shape = 'u32[144,128]{1,0:T(1,128)}', space=vmem, size = 0x12000, scoped, tag = 'internal scratch']
  %s0 = inlined_call_operand.vmem [shape: f32[8,256], index: 0, kind: input, shape index: {}]
  %s1 = inlined_call_operand.hbm [shape: f32[9,8,256], index: 1, kind: input, shape index: {}]
  %s2 = inlined_call_operand.vmem [shape: f32[8,42], index: 2, kind: input, shape index: {}]
  %s3 = inlined_call_operand.vmem [shape: f32[32,9], index: 3, kind: input, shape index: {}]
  %s4 = inlined_call_operand.hbm [shape: f32[8,256], index: 4, kind: output, shape index: {}]
  %s5 = sld [smem:[#allocation0]]
  $region30: #{tpu_custom_call.1} parent=0
    _
  %s7 = ssub.s32 1, %s5
  %s8 = scalar_select 0, %s7, %s5
  $region1: #{tpu_custom_call.1} parent=0
    #allocation2 [shape = 'u8[73728]{0}', space=vmem, size = 0x12000, scoped, tag = 'input window, operand 1, single buffered']
    #allocation3 [shape = 's32[1]{0}', space=sflag, size = 0x4, scoped, tag = 'scoped memory for tpu_custom_call.1']
    #allocation4 [shape = 's32[1]{0}', space=sflag, size = 0x4, scoped, tag = 'scoped memory for tpu_custom_call.1']
    #allocation5 [shape = 'u8[8192]{0}', space=vmem, size = 0x2000, scoped, tag = 'output window, operand 0, single buffered']
    %9 = vsyncpa [#allocation3], 0
    %10 = vsyncpa [#allocation4], 0
    // Predicated region
    $region2: #{tpu_custom_call.1} parent=1 // pred_check
      _
    $region3: #{tpu_custom_call.1} parent=1 // pred_check_branch
      %12 = sbr.rel (0) target = $region5
    $region4: #{tpu_custom_call.1} parent=1 // pred_region
      _
    $region5: #{tpu_custom_call.1} parent=1 // pred_fallthru
      _
    // Predicated region
    $region6: #{tpu_custom_call.1} parent=1 // pred_check
      _
    $region7: #{tpu_custom_call.1} parent=1 // pred_check_branch
      %14 = sbr.rel (0) target = $region9
    $region8: #{tpu_custom_call.1} parent=1 // pred_region
      %s16 = ssub.s32 2304, 2304
      %17 = vsyncadd [#allocation3], %s16
      %s18 = sshll.u32 [#allocation2], 4
      %s19 = int_to_ptr.vmem [resolvable:$true] %s18
      %24 = dma.hbm_to_vmem [thread:$0]  %s1, 2304, %s19, [#allocation3], 256, 256, 16
    $region9: #{tpu_custom_call.1} parent=1 // pred_fallthru
      _
    // Predicated region
    $region10: #{tpu_custom_call.1} parent=1 // pred_check
      _
    $region11: #{tpu_custom_call.1} parent=1 // pred_check_branch
      %26 = sbr.rel (0) target = $region13
    $region12: #{tpu_custom_call.1} parent=1 // pred_region
      _
    $region13: #{tpu_custom_call.1} parent=1 // pred_fallthru
      _
    // Predicated region
    $region14: #{tpu_custom_call.1} parent=1 // pred_check
      _
    $region15: #{tpu_custom_call.1} parent=1 // pred_check_branch
      %28 = sbr.rel (0) target = $region17
    $region16: #{tpu_custom_call.1} parent=1 // pred_region
      _
    $region17: #{tpu_custom_call.1} parent=1 // pred_fallthru
      _
    // Predicated region
    $region18: #{tpu_custom_call.1} parent=1 // pred_check
      _
    $region19: #{tpu_custom_call.1} parent=1 // pred_check_branch
      %30 = sbr.rel (0) target = $region21
    $region20: #{tpu_custom_call.1} parent=1 // pred_region
      %31 = dma.done [#allocation3], 2304
    $region21: #{tpu_custom_call.1} parent=1 // pred_fallthru
      _
    %v32 = vld [vmem:[%s0] sm:$0xff]
    %v33 = vld [vmem:[%s0 + $0x8] sm:$0xff]
    %34 = vrot.lane.b32.xlu0 %v32, 17
    %v35 = vpop.permute.xlu0 %34
    %36 = vrot.lane.b32.xlu0 %v33, 17
    %v37 = vpop.permute.xlu0 %36
    %v38 = vlaneseq
    %v39 = vand.u32 %v38, 127
    %vm40 = vcmp.lt.s32.totalorder %v39, 17
    %v41 = vsel %vm40, %v35, %v37
    %v42 = vsel %vm40, %v37, %v35
    %v43 = vld [vmem:[#allocation2] sm:$0xff]
    %v44 = vld [vmem:[#allocation2 + $0x8] sm:$0xff]
    %v45 = vmul.f32 %v42, %v43
    %v46 = vmul.f32 %v41, %v44
    %v47 = vadd.f32 %v45, 0.0
    %v48 = vadd.f32 %v46, 0.0
    %49 = vrot.lane.b32.xlu0 %v32, 16
    %v50 = vpop.permute.xlu0 %49
    %51 = vrot.lane.b32.xlu0 %v33, 16
    %v52 = vpop.permute.xlu0 %51
    %vm53 = vcmp.lt.s32.totalorder %v39, 16
    %v54 = vsel %vm53, %v50, %v52
    %v55 = vsel %vm53, %v52, %v50
    %s56 = scalar_lea.vmem [#allocation2], 16
    %v57 = vld [vmem:[%s56] sm:$0xff]
    %v58 = vld [vmem:[%s56 + $0x8] sm:$0xff]
    %v59 = vmul.f32 %v55, %v57
    %v60 = vmul.f32 %v54, %v58
    %v61 = vadd.f32 %v47, %v59
    %v62 = vadd.f32 %v48, %v60
    %63 = vrot.lane.b32.xlu0 %v32, 15
    %v64 = vpop.permute.xlu0 %63
    %65 = vrot.lane.b32.xlu0 %v33, 15
    %v66 = vpop.permute.xlu0 %65
    %vm67 = vcmp.lt.s32.totalorder %v39, 15
    %v68 = vsel %vm67, %v64, %v66
    %v69 = vsel %vm67, %v66, %v64
    %s70 = scalar_lea.vmem [#allocation2], 32
    %v71 = vld [vmem:[%s70] sm:$0xff]
    %v72 = vld [vmem:[%s70 + $0x8] sm:$0xff]
    %v73 = vmul.f32 %v69, %v71
    %v74 = vmul.f32 %v68, %v72
    %v75 = vadd.f32 %v61, %v73
    %v76 = vadd.f32 %v62, %v74
    %77 = vrot.lane.b32.xlu0 %v32, 1
    %v78 = vpop.permute.xlu0 %77
    %79 = vrot.lane.b32.xlu0 %v33, 1
    %v80 = vpop.permute.xlu0 %79
    %vm81 = vcmp.lt.s32.totalorder %v39, 1
    %v82 = vsel %vm81, %v78, %v80
    %v83 = vsel %vm81, %v80, %v78
    %s84 = scalar_lea.vmem [#allocation2], 48
    %v85 = vld [vmem:[%s84] sm:$0xff]
    %v86 = vld [vmem:[%s84 + $0x8] sm:$0xff]
    %v87 = vmul.f32 %v83, %v85
    %v88 = vmul.f32 %v82, %v86
    %v89 = vadd.f32 %v75, %v87
    %v90 = vadd.f32 %v76, %v88
    %s91 = scalar_lea.vmem [#allocation2], 64
    %v92 = vld [vmem:[%s91] sm:$0xff]
    %v93 = vld [vmem:[%s91 + $0x8] sm:$0xff]
    %v94 = vmul.f32 %v32, %v92
    %v95 = vmul.f32 %v33, %v93
    %v96 = vadd.f32 %v89, %v94
    %v97 = vadd.f32 %v90, %v95
    %98 = vrot.lane.b32.xlu0 %v32, 127
    %v99 = vpop.permute.xlu0 %98
    %100 = vrot.lane.b32.xlu0 %v33, 127
    %v101 = vpop.permute.xlu0 %100
    %vm102 = vcmp.lt.s32.totalorder %v39, 127
    %v103 = vsel %vm102, %v99, %v101
    %v104 = vsel %vm102, %v101, %v99
    %s105 = scalar_lea.vmem [#allocation2], 80
    %v106 = vld [vmem:[%s105] sm:$0xff]
    %v107 = vld [vmem:[%s105 + $0x8] sm:$0xff]
    %v108 = vmul.f32 %v103, %v106
    %v109 = vmul.f32 %v104, %v107
    %v110 = vadd.f32 %v96, %v108
    %v111 = vadd.f32 %v97, %v109
    %112 = vrot.lane.b32.xlu0 %v32, 113
    %v113 = vpop.permute.xlu0 %112
    %114 = vrot.lane.b32.xlu0 %v33, 113
    %v115 = vpop.permute.xlu0 %114
    %vm116 = vcmp.lt.s32.totalorder %v39, 113
    %v117 = vsel %vm116, %v113, %v115
    %v118 = vsel %vm116, %v115, %v113
    %s119 = scalar_lea.vmem [#allocation2], 96
    %v120 = vld [vmem:[%s119] sm:$0xff]
    %v121 = vld [vmem:[%s119 + $0x8] sm:$0xff]
    %v122 = vmul.f32 %v117, %v120
    %v123 = vmul.f32 %v118, %v121
    %v124 = vadd.f32 %v110, %v122
    %v125 = vadd.f32 %v111, %v123
    %126 = vrot.lane.b32.xlu0 %v32, 112
    %v127 = vpop.permute.xlu0 %126
    %128 = vrot.lane.b32.xlu0 %v33, 112
    %v129 = vpop.permute.xlu0 %128
    %vm130 = vcmp.lt.s32.totalorder %v39, 112
    %v131 = vsel %vm130, %v127, %v129
    %v132 = vsel %vm130, %v129, %v127
    %s133 = scalar_lea.vmem [#allocation2], 112
    %v134 = vld [vmem:[%s133] sm:$0xff]
    %v135 = vld [vmem:[%s133 + $0x8] sm:$0xff]
    %v136 = vmul.f32 %v131, %v134
    %v137 = vmul.f32 %v132, %v135
    %v138 = vadd.f32 %v124, %v136
    %v139 = vadd.f32 %v125, %v137
    %140 = vrot.lane.b32.xlu0 %v32, 111
    %v141 = vpop.permute.xlu0 %140
    %142 = vrot.lane.b32.xlu0 %v33, 111
    %v143 = vpop.permute.xlu0 %142
    %vm144 = vcmp.lt.s32.totalorder %v39, 111
    %v145 = vsel %vm144, %v141, %v143
    %v146 = vsel %vm144, %v143, %v141
    %s147 = scalar_lea.vmem [#allocation2], 128
    %v148 = vld [vmem:[%s147] sm:$0xff]
    %v149 = vld [vmem:[%s147 + $0x8] sm:$0xff]
    %v150 = vmul.f32 %v145, %v148
    %v151 = vmul.f32 %v146, %v149
    %v152 = vadd.f32 %v138, %v150
    %v153 = vadd.f32 %v139, %v151
    %v154 = vld [vmem:[%s2] sm:$0xff]
    %156 = vset.pattern.permute.xlu0 40
    %157 = vperm.xlu0 %156, %v154
    %v158 = vpop.permute.xlu0 %157
    %v160 = vadd.f32 %v152, %v158
    %v161 = vadd.f32 %v153, %v158
    %162 = vrot.lane.b32.xlu0 %v154, 96
    %v163 = vpop.permute.xlu0 %162
    %vm164 = vcmask 64512
    %v165 = vsel %vm164, %v163, 0
    %167 = vmatprep.subr.mxu0 0.0
    %168 = vmatpush1.msra.mxu0 0.0
    %169 = vmatprep.subr.mxu0 0.0
    %170 = vmatpush1.msra.mxu0 0.0
    %171 = vmatprep.subr.mxu0 0.0
    %172 = vmatpush1.msra.mxu0 0.0
    %173 = vmatprep.subr.mxu0 0.0
    %174 = vmatpush1.msra.mxu0 0.0
    %175 = vmatprep.subr.mxu0 0.0
    %176 = vmatpush1.msra.mxu0 0.0
    %177 = vmatprep.subr.mxu0 0.0
    %178 = vmatpush1.msra.mxu0 0.0
    %179 = vmatprep.subr.mxu0 0.0
    %180 = vmatpush1.msra.mxu0 0.0
    %181 = vmatprep.subr.mxu0 0.0
    %182 = vmatpush1.msra.mxu0 0.0
    %183 = vmatprep.subr.mxu0 0.0
    %184 = vmatpush1.msra.mxu0 0.0
    %185 = vmatprep.subr.mxu0 0.0
    %186 = vmatpush1.msra.mxu0 0.0
    %187 = vmatprep.subr.mxu0 0.0
    %188 = vmatpush1.msra.mxu0 0.0
    %189 = vmatprep.subr.mxu0 0.0
    %190 = vmatpush1.msra.mxu0 0.0
    %191 = vmatprep.subr.mxu0 0.0
    %192 = vmatpush1.msra.mxu0 0.0
    %193 = vmatprep.subr.mxu0 0.0
    %194 = vmatpush1.msra.mxu0 0.0
    %195 = vmatprep.subr.mxu0 0.0
    %196 = vmatpush1.msra.mxu0 0.0
    %v197 = vand.u32 %v161, 4294901760
    %198 = vmatprep.subr.mxu0 %v197
    %v199 = vand.u32 %v160, 4294901760
    %200 = vmatpush1.msra.mxu0 %v199
    %201 = vmatprep.subr.mxu0 0.0
    %202 = vmatpush2.msra.mxu0 0.0
    %203 = vmatprep.subr.mxu0 0.0
    %204 = vmatpush2.msra.mxu0 0.0
    %205 = vmatprep.subr.mxu0 0.0
    %206 = vmatpush2.msra.mxu0 0.0
    %207 = vmatprep.subr.mxu0 0.0
    %208 = vmatpush2.msra.mxu0 0.0
    %209 = vmatprep.subr.mxu0 0.0
    %210 = vmatpush2.msra.mxu0 0.0
    %211 = vmatprep.subr.mxu0 0.0
    %212 = vmatpush2.msra.mxu0 0.0
    %213 = vmatprep.subr.mxu0 0.0
    %214 = vmatpush2.msra.mxu0 0.0
    %215 = vmatprep.subr.mxu0 0.0
    %216 = vmatpush2.msra.mxu0 0.0
    %217 = vmatprep.subr.mxu0 0.0
    %218 = vmatpush2.msra.mxu0 0.0
    %219 = vmatprep.subr.mxu0 0.0
    %220 = vmatpush2.msra.mxu0 0.0
    %221 = vmatprep.subr.mxu0 0.0
    %222 = vmatpush2.msra.mxu0 0.0
    %223 = vmatprep.subr.mxu0 0.0
    %224 = vmatpush2.msra.mxu0 0.0
    %225 = vmatprep.subr.mxu0 0.0
    %226 = vmatpush2.msra.mxu0 0.0
    %227 = vmatprep.subr.mxu0 0.0
    %228 = vmatpush2.msra.mxu0 0.0
    %229 = vmatprep.subr.mxu0 0.0
    %230 = vmatpush2.msra.mxu0 0.0
    %231 = vmatprep.subr.mxu0 0.0
    %232 = vmatpush2.msra.mxu0 0.0
    %233 = vmatprep.mubr.f32.mxu0 0.0
    %v234 = vand.u32 %v165, 4294901760
    %v235 = vsub.f32 %v165, %v234
    %v236 = vand.u32 %v235, 4294901760
    %v237 = vsub.f32 %v235, %v236
    %v238 = vand.u32 %v237, 4294901760
    %239 = vmatmul.mubr.f32.gmra.mxu0 %v238
    %v240 = vpop.f32.mrf.mxu0
    %v241 = vadd.f32 0.0, %v240
    %v242 = vpop.f32.mrf.mxu0
    %v243 = vadd.f32 0.0, %v242
    %244 = vdwg.mxu0
    %245 = vmatprep.subr.mxu0 0.0
    %246 = vmatpush1.msra.mxu0 0.0
    %247 = vmatprep.subr.mxu0 0.0
    %248 = vmatpush1.msra.mxu0 0.0
    %249 = vmatprep.subr.mxu0 0.0
    %250 = vmatpush1.msra.mxu0 0.0
    %251 = vmatprep.subr.mxu0 0.0
    %252 = vmatpush1.msra.mxu0 0.0
    %253 = vmatprep.subr.mxu0 0.0
    %254 = vmatpush1.msra.mxu0 0.0
    %255 = vmatprep.subr.mxu0 0.0
    %256 = vmatpush1.msra.mxu0 0.0
    %257 = vmatprep.subr.mxu0 0.0
    %258 = vmatpush1.msra.mxu0 0.0
    %259 = vmatprep.subr.mxu0 0.0
    %260 = vmatpush1.msra.mxu0 0.0
    %261 = vmatprep.subr.mxu0 0.0
    %262 = vmatpush1.msra.mxu0 0.0
    %263 = vmatprep.subr.mxu0 0.0
    %264 = vmatpush1.msra.mxu0 0.0
    %265 = vmatprep.subr.mxu0 0.0
    %266 = vmatpush1.msra.mxu0 0.0
    %267 = vmatprep.subr.mxu0 0.0
    %268 = vmatpush1.msra.mxu0 0.0
    %269 = vmatprep.subr.mxu0 0.0
    %270 = vmatpush1.msra.mxu0 0.0
    %271 = vmatprep.subr.mxu0 0.0
    %272 = vmatpush1.msra.mxu0 0.0
    %273 = vmatprep.subr.mxu0 0.0
    %274 = vmatpush1.msra.mxu0 0.0
    %v275 = vand.u32 %v161, 4294901760
    %v276 = vsub.f32 %v161, %v275
    %v277 = vand.u32 %v276, 4294901760
    %v278 = vsub.f32 %v276, %v277
    %v279 = vand.u32 %v278, 4294901760
    %280 = vmatprep.subr.mxu0 %v279
    %v281 = vand.u32 %v160, 4294901760
    %v282 = vsub.f32 %v160, %v281
    %v283 = vand.u32 %v282, 4294901760
    %v284 = vsub.f32 %v282, %v283
    %v285 = vand.u32 %v284, 4294901760
    %286 = vmatpush1.msra.mxu0 %v285
    %287 = vmatprep.subr.mxu0 0.0
    %288 = vmatpush2.msra.mxu0 0.0
    %289 = vmatprep.subr.mxu0 0.0
    %290 = vmatpush2.msra.mxu0 0.0
    %291 = vmatprep.subr.mxu0 0.0
    %292 = vmatpush2.msra.mxu0 0.0
    %293 = vmatprep.subr.mxu0 0.0
    %294 = vmatpush2.msra.mxu0 0.0
    %295 = vmatprep.subr.mxu0 0.0
    %296 = vmatpush2.msra.mxu0 0.0
    %297 = vmatprep.subr.mxu0 0.0
    %298 = vmatpush2.msra.mxu0 0.0
    %299 = vmatprep.subr.mxu0 0.0
    %300 = vmatpush2.msra.mxu0 0.0
    %301 = vmatprep.subr.mxu0 0.0
    %302 = vmatpush2.msra.mxu0 0.0
    %303 = vmatprep.subr.mxu0 0.0
    %304 = vmatpush2.msra.mxu0 0.0
    %305 = vmatprep.subr.mxu0 0.0
    %306 = vmatpush2.msra.mxu0 0.0
    %307 = vmatprep.subr.mxu0 0.0
    %308 = vmatpush2.msra.mxu0 0.0
    %309 = vmatprep.subr.mxu0 0.0
    %310 = vmatpush2.msra.mxu0 0.0
    %311 = vmatprep.subr.mxu0 0.0
    %312 = vmatpush2.msra.mxu0 0.0
    %313 = vmatprep.subr.mxu0 0.0
    %314 = vmatpush2.msra.mxu0 0.0
    %315 = vmatprep.subr.mxu0 0.0
    %316 = vmatpush2.msra.mxu0 0.0
    %317 = vmatprep.subr.mxu0 0.0
    %318 = vmatpush2.msra.mxu0 0.0
    %319 = vmatprep.mubr.f32.mxu0 0.0
    %v320 = vand.u32 %v165, 4294901760
    %321 = vmatmul.mubr.f32.gmra.mxu0 %v320
    %v322 = vpop.f32.mrf.mxu0
    %v323 = vadd.f32 %v241, %v322
    %v324 = vpop.f32.mrf.mxu0
    %v325 = vadd.f32 %v243, %v324
    %326 = vdwg.mxu0
    %327 = vmatprep.subr.mxu0 0.0
    %328 = vmatpush1.msra.mxu0 0.0
    %329 = vmatprep.subr.mxu0 0.0
    %330 = vmatpush1.msra.mxu0 0.0
    %331 = vmatprep.subr.mxu0 0.0
    %332 = vmatpush1.msra.mxu0 0.0
    %333 = vmatprep.subr.mxu0 0.0
    %334 = vmatpush1.msra.mxu0 0.0
    %335 = vmatprep.subr.mxu0 0.0
    %336 = vmatpush1.msra.mxu0 0.0
    %337 = vmatprep.subr.mxu0 0.0
    %338 = vmatpush1.msra.mxu0 0.0
    %339 = vmatprep.subr.mxu0 0.0
    %340 = vmatpush1.msra.mxu0 0.0
    %341 = vmatprep.subr.mxu0 0.0
    %342 = vmatpush1.msra.mxu0 0.0
    %343 = vmatprep.subr.mxu0 0.0
    %344 = vmatpush1.msra.mxu0 0.0
    %345 = vmatprep.subr.mxu0 0.0
    %346 = vmatpush1.msra.mxu0 0.0
    %347 = vmatprep.subr.mxu0 0.0
    %348 = vmatpush1.msra.mxu0 0.0
    %349 = vmatprep.subr.mxu0 0.0
    %350 = vmatpush1.msra.mxu0 0.0
    %351 = vmatprep.subr.mxu0 0.0
    %352 = vmatpush1.msra.mxu0 0.0
    %353 = vmatprep.subr.mxu0 0.0
    %354 = vmatpush1.msra.mxu0 0.0
    %355 = vmatprep.subr.mxu0 0.0
    %356 = vmatpush1.msra.mxu0 0.0
    %v357 = vand.u32 %v161, 4294901760
    %v358 = vsub.f32 %v161, %v357
    %359 = vmatprep.subr.mxu0 %v358
    %v360 = vand.u32 %v160, 4294901760
    %v361 = vsub.f32 %v160, %v360
    %362 = vmatpush1.msra.mxu0 %v361
    %363 = vmatprep.subr.mxu0 0.0
    %364 = vmatpush2.msra.mxu0 0.0
    %365 = vmatprep.subr.mxu0 0.0
    %366 = vmatpush2.msra.mxu0 0.0
    %367 = vmatprep.subr.mxu0 0.0
    %368 = vmatpush2.msra.mxu0 0.0
    %369 = vmatprep.subr.mxu0 0.0
    %370 = vmatpush2.msra.mxu0 0.0
    %371 = vmatprep.subr.mxu0 0.0
    %372 = vmatpush2.msra.mxu0 0.0
    %373 = vmatprep.subr.mxu0 0.0
    %374 = vmatpush2.msra.mxu0 0.0
    %375 = vmatprep.subr.mxu0 0.0
    %376 = vmatpush2.msra.mxu0 0.0
    %377 = vmatprep.subr.mxu0 0.0
    %378 = vmatpush2.msra.mxu0 0.0
    %379 = vmatprep.subr.mxu0 0.0
    %380 = vmatpush2.msra.mxu0 0.0
    %381 = vmatprep.subr.mxu0 0.0
    %382 = vmatpush2.msra.mxu0 0.0
    %383 = vmatprep.subr.mxu0 0.0
    %384 = vmatpush2.msra.mxu0 0.0
    %385 = vmatprep.subr.mxu0 0.0
    %386 = vmatpush2.msra.mxu0 0.0
    %387 = vmatprep.subr.mxu0 0.0
    %388 = vmatpush2.msra.mxu0 0.0
    %389 = vmatprep.subr.mxu0 0.0
    %390 = vmatpush2.msra.mxu0 0.0
    %391 = vmatprep.subr.mxu0 0.0
    %392 = vmatpush2.msra.mxu0 0.0
    %393 = vmatprep.subr.mxu0 0.0
    %394 = vmatpush2.msra.mxu0 0.0
    %395 = vmatprep.mubr.f32.mxu0 0.0
    %v396 = vand.u32 %v165, 4294901760
    %v397 = vsub.f32 %v165, %v396
    %398 = vmatmul.mubr.f32.gmra.mxu0 %v397
    %v399 = vpop.f32.mrf.mxu0
    %v400 = vadd.f32 %v323, %v399
    %v401 = vpop.f32.mrf.mxu0
    %v402 = vadd.f32 %v325, %v401
    %403 = vdwg.mxu0
    %404 = vmatprep.subr.mxu0 0.0
    %405 = vmatpush1.msra.mxu0 0.0
    %406 = vmatprep.subr.mxu0 0.0
    %407 = vmatpush1.msra.mxu0 0.0
    %408 = vmatprep.subr.mxu0 0.0
    %409 = vmatpush1.msra.mxu0 0.0
    %410 = vmatprep.subr.mxu0 0.0
    %411 = vmatpush1.msra.mxu0 0.0
    %412 = vmatprep.subr.mxu0 0.0
    %413 = vmatpush1.msra.mxu0 0.0
    %414 = vmatprep.subr.mxu0 0.0
    %415 = vmatpush1.msra.mxu0 0.0
    %416 = vmatprep.subr.mxu0 0.0
    %417 = vmatpush1.msra.mxu0 0.0
    %418 = vmatprep.subr.mxu0 0.0
    %419 = vmatpush1.msra.mxu0 0.0
    %420 = vmatprep.subr.mxu0 0.0
    %421 = vmatpush1.msra.mxu0 0.0
    %422 = vmatprep.subr.mxu0 0.0
    %423 = vmatpush1.msra.mxu0 0.0
    %424 = vmatprep.subr.mxu0 0.0
    %425 = vmatpush1.msra.mxu0 0.0
    %426 = vmatprep.subr.mxu0 0.0
    %427 = vmatpush1.msra.mxu0 0.0
    %428 = vmatprep.subr.mxu0 0.0
    %429 = vmatpush1.msra.mxu0 0.0
    %430 = vmatprep.subr.mxu0 0.0
    %431 = vmatpush1.msra.mxu0 0.0
    %432 = vmatprep.subr.mxu0 0.0
    %433 = vmatpush1.msra.mxu0 0.0
    %v434 = vand.u32 %v161, 4294901760
    %435 = vmatprep.subr.mxu0 %v434
    %v436 = vand.u32 %v160, 4294901760
    %437 = vmatpush1.msra.mxu0 %v436
    %438 = vmatprep.subr.mxu0 0.0
    %439 = vmatpush2.msra.mxu0 0.0
    %440 = vmatprep.subr.mxu0 0.0
    %441 = vmatpush2.msra.mxu0 0.0
    %442 = vmatprep.subr.mxu0 0.0
    %443 = vmatpush2.msra.mxu0 0.0
    %444 = vmatprep.subr.mxu0 0.0
    %445 = vmatpush2.msra.mxu0 0.0
    %446 = vmatprep.subr.mxu0 0.0
    %447 = vmatpush2.msra.mxu0 0.0
    %448 = vmatprep.subr.mxu0 0.0
    %449 = vmatpush2.msra.mxu0 0.0
    %450 = vmatprep.subr.mxu0 0.0
    %451 = vmatpush2.msra.mxu0 0.0
    %452 = vmatprep.subr.mxu0 0.0
    %453 = vmatpush2.msra.mxu0 0.0
    %454 = vmatprep.subr.mxu0 0.0
    %455 = vmatpush2.msra.mxu0 0.0
    %456 = vmatprep.subr.mxu0 0.0
    %457 = vmatpush2.msra.mxu0 0.0
    %458 = vmatprep.subr.mxu0 0.0
    %459 = vmatpush2.msra.mxu0 0.0
    %460 = vmatprep.subr.mxu0 0.0
    %461 = vmatpush2.msra.mxu0 0.0
    %462 = vmatprep.subr.mxu0 0.0
    %463 = vmatpush2.msra.mxu0 0.0
    %464 = vmatprep.subr.mxu0 0.0
    %465 = vmatpush2.msra.mxu0 0.0
    %466 = vmatprep.subr.mxu0 0.0
    %467 = vmatpush2.msra.mxu0 0.0
    %468 = vmatprep.subr.mxu0 0.0
    %469 = vmatpush2.msra.mxu0 0.0
    %470 = vmatprep.mubr.f32.mxu0 0.0
    %v471 = vand.u32 %v165, 4294901760
    %v472 = vsub.f32 %v165, %v471
    %v473 = vand.u32 %v472, 4294901760
    %474 = vmatmul.mubr.f32.gmra.mxu0 %v473
    %v475 = vpop.f32.mrf.mxu0
    %v476 = vadd.f32 %v400, %v475
    %v477 = vpop.f32.mrf.mxu0
    %v478 = vadd.f32 %v402, %v477
    %479 = vdwg.mxu0
    %480 = vmatprep.subr.mxu0 0.0
    %481 = vmatpush1.msra.mxu0 0.0
    %482 = vmatprep.subr.mxu0 0.0
    %483 = vmatpush1.msra.mxu0 0.0
    %484 = vmatprep.subr.mxu0 0.0
    %485 = vmatpush1.msra.mxu0 0.0
    %486 = vmatprep.subr.mxu0 0.0
    %487 = vmatpush1.msra.mxu0 0.0
    %488 = vmatprep.subr.mxu0 0.0
    %489 = vmatpush1.msra.mxu0 0.0
    %490 = vmatprep.subr.mxu0 0.0
    %491 = vmatpush1.msra.mxu0 0.0
    %492 = vmatprep.subr.mxu0 0.0
    %493 = vmatpush1.msra.mxu0 0.0
    %494 = vmatprep.subr.mxu0 0.0
    %495 = vmatpush1.msra.mxu0 0.0
    %496 = vmatprep.subr.mxu0 0.0
    %497 = vmatpush1.msra.mxu0 0.0
    %498 = vmatprep.subr.mxu0 0.0
    %499 = vmatpush1.msra.mxu0 0.0
    %500 = vmatprep.subr.mxu0 0.0
    %501 = vmatpush1.msra.mxu0 0.0
    %502 = vmatprep.subr.mxu0 0.0
    %503 = vmatpush1.msra.mxu0 0.0
    %504 = vmatprep.subr.mxu0 0.0
    %505 = vmatpush1.msra.mxu0 0.0
    %506 = vmatprep.subr.mxu0 0.0
    %507 = vmatpush1.msra.mxu0 0.0
    %508 = vmatprep.subr.mxu0 0.0
    %509 = vmatpush1.msra.mxu0 0.0
    %v510 = vand.u32 %v161, 4294901760
    %v511 = vsub.f32 %v161, %v510
    %v512 = vand.u32 %v511, 4294901760
    %513 = vmatprep.subr.mxu0 %v512
    %v514 = vand.u32 %v160, 4294901760
    %v515 = vsub.f32 %v160, %v514
    %v516 = vand.u32 %v515, 4294901760
    %517 = vmatpush1.msra.mxu0 %v516
    %518 = vmatprep.subr.mxu0 0.0
    %519 = vmatpush2.msra.mxu0 0.0
    %520 = vmatprep.subr.mxu0 0.0
    %521 = vmatpush2.msra.mxu0 0.0
    %522 = vmatprep.subr.mxu0 0.0
    %523 = vmatpush2.msra.mxu0 0.0
    %524 = vmatprep.subr.mxu0 0.0
    %525 = vmatpush2.msra.mxu0 0.0
    %526 = vmatprep.subr.mxu0 0.0
    %527 = vmatpush2.msra.mxu0 0.0
    %528 = vmatprep.subr.mxu0 0.0
    %529 = vmatpush2.msra.mxu0 0.0
    %530 = vmatprep.subr.mxu0 0.0
    %531 = vmatpush2.msra.mxu0 0.0
    %532 = vmatprep.subr.mxu0 0.0
    %533 = vmatpush2.msra.mxu0 0.0
    %534 = vmatprep.subr.mxu0 0.0
    %535 = vmatpush2.msra.mxu0 0.0
    %536 = vmatprep.subr.mxu0 0.0
    %537 = vmatpush2.msra.mxu0 0.0
    %538 = vmatprep.subr.mxu0 0.0
    %539 = vmatpush2.msra.mxu0 0.0
    %540 = vmatprep.subr.mxu0 0.0
    %541 = vmatpush2.msra.mxu0 0.0
    %542 = vmatprep.subr.mxu0 0.0
    %543 = vmatpush2.msra.mxu0 0.0
    %544 = vmatprep.subr.mxu0 0.0
    %545 = vmatpush2.msra.mxu0 0.0
    %546 = vmatprep.subr.mxu0 0.0
    %547 = vmatpush2.msra.mxu0 0.0
    %548 = vmatprep.subr.mxu0 0.0
    %549 = vmatpush2.msra.mxu0 0.0
    %550 = vmatprep.mubr.f32.mxu0 0.0
    %v551 = vand.u32 %v165, 4294901760
    %552 = vmatmul.mubr.f32.gmra.mxu0 %v551
    %v553 = vpop.f32.mrf.mxu0
    %v554 = vadd.f32 %v476, %v553
    %v555 = vpop.f32.mrf.mxu0
    %v556 = vadd.f32 %v478, %v555
    %557 = vdwg.mxu0
    %558 = vmatprep.subr.mxu0 0.0
    %559 = vmatpush1.msra.mxu0 0.0
    %560 = vmatprep.subr.mxu0 0.0
    %561 = vmatpush1.msra.mxu0 0.0
    %562 = vmatprep.subr.mxu0 0.0
    %563 = vmatpush1.msra.mxu0 0.0
    %564 = vmatprep.subr.mxu0 0.0
    %565 = vmatpush1.msra.mxu0 0.0
    %566 = vmatprep.subr.mxu0 0.0
    %567 = vmatpush1.msra.mxu0 0.0
    %568 = vmatprep.subr.mxu0 0.0
    %569 = vmatpush1.msra.mxu0 0.0
    %570 = vmatprep.subr.mxu0 0.0
    %571 = vmatpush1.msra.mxu0 0.0
    %572 = vmatprep.subr.mxu0 0.0
    %573 = vmatpush1.msra.mxu0 0.0
    %574 = vmatprep.subr.mxu0 0.0
    %575 = vmatpush1.msra.mxu0 0.0
    %576 = vmatprep.subr.mxu0 0.0
    %577 = vmatpush1.msra.mxu0 0.0
    %578 = vmatprep.subr.mxu0 0.0
    %579 = vmatpush1.msra.mxu0 0.0
    %580 = vmatprep.subr.mxu0 0.0
    %581 = vmatpush1.msra.mxu0 0.0
    %582 = vmatprep.subr.mxu0 0.0
    %583 = vmatpush1.msra.mxu0 0.0
    %584 = vmatprep.subr.mxu0 0.0
    %585 = vmatpush1.msra.mxu0 0.0
    %586 = vmatprep.subr.mxu0 0.0
    %587 = vmatpush1.msra.mxu0 0.0
    %v588 = vand.u32 %v161, 4294901760
    %589 = vmatprep.subr.mxu0 %v588
    %v590 = vand.u32 %v160, 4294901760
    %591 = vmatpush1.msra.mxu0 %v590
    %592 = vmatprep.subr.mxu0 0.0
    %593 = vmatpush2.msra.mxu0 0.0
    %594 = vmatprep.subr.mxu0 0.0
    %595 = vmatpush2.msra.mxu0 0.0
    %596 = vmatprep.subr.mxu0 0.0
    %597 = vmatpush2.msra.mxu0 0.0
    %598 = vmatprep.subr.mxu0 0.0
    %599 = vmatpush2.msra.mxu0 0.0
    %600 = vmatprep.subr.mxu0 0.0
    %601 = vmatpush2.msra.mxu0 0.0
    %602 = vmatprep.subr.mxu0 0.0
    %603 = vmatpush2.msra.mxu0 0.0
    %604 = vmatprep.subr.mxu0 0.0
    %605 = vmatpush2.msra.mxu0 0.0
    %606 = vmatprep.subr.mxu0 0.0
    %607 = vmatpush2.msra.mxu0 0.0
    %608 = vmatprep.subr.mxu0 0.0
    %609 = vmatpush2.msra.mxu0 0.0
    %610 = vmatprep.subr.mxu0 0.0
    %611 = vmatpush2.msra.mxu0 0.0
    %612 = vmatprep.subr.mxu0 0.0
    %613 = vmatpush2.msra.mxu0 0.0
    %614 = vmatprep.subr.mxu0 0.0
    %615 = vmatpush2.msra.mxu0 0.0
    %616 = vmatprep.subr.mxu0 0.0
    %617 = vmatpush2.msra.mxu0 0.0
    %618 = vmatprep.subr.mxu0 0.0
    %619 = vmatpush2.msra.mxu0 0.0
    %620 = vmatprep.subr.mxu0 0.0
    %621 = vmatpush2.msra.mxu0 0.0
    %622 = vmatprep.subr.mxu0 0.0
    %623 = vmatpush2.msra.mxu0 0.0
    %624 = vmatprep.mubr.f32.mxu0 0.0
    %v625 = vand.u32 %v165, 4294901760
    %626 = vmatmul.mubr.f32.gmra.mxu0 %v625
    %v627 = vpop.f32.mrf.mxu0
    %v628 = vadd.f32 %v554, %v627
    %v629 = vpop.f32.mrf.mxu0
    %v630 = vadd.f32 %v556, %v629
    %631 = vdwg.mxu0
    %v632 = vsub.f32 %v160, %v628
    %v633 = vsub.f32 %v161, %v630
    %v634 = vmul.f32 %v632, %v632
    %v635 = vmul.f32 %v633, %v633
    %636 = vmatprep.subr.mxu0 0.0
    %637 = vmatpush1.msra.mxu0 0.0
    %638 = vmatprep.subr.mxu0 0.0
    %639 = vmatpush1.msra.mxu0 0.0
    %640 = vmatprep.subr.mxu0 0.0
    %641 = vmatpush1.msra.mxu0 0.0
    %642 = vmatprep.subr.mxu0 0.0
    %643 = vmatpush1.msra.mxu0 0.0
    %644 = vmatprep.subr.mxu0 0.0
    %645 = vmatpush1.msra.mxu0 0.0
    %646 = vmatprep.subr.mxu0 0.0
    %647 = vmatpush1.msra.mxu0 0.0
    %648 = vmatprep.subr.mxu0 0.0
    %649 = vmatpush1.msra.mxu0 0.0
    %650 = vmatprep.subr.mxu0 0.0
    %651 = vmatpush1.msra.mxu0 0.0
    %652 = vmatprep.subr.mxu0 0.0
    %653 = vmatpush1.msra.mxu0 0.0
    %654 = vmatprep.subr.mxu0 0.0
    %655 = vmatpush1.msra.mxu0 0.0
    %656 = vmatprep.subr.mxu0 0.0
    %657 = vmatpush1.msra.mxu0 0.0
    %658 = vmatprep.subr.mxu0 0.0
    %659 = vmatpush1.msra.mxu0 0.0
    %660 = vmatprep.subr.mxu0 0.0
    %661 = vmatpush1.msra.mxu0 0.0
    %662 = vmatprep.subr.mxu0 0.0
    %663 = vmatpush1.msra.mxu0 0.0
    %664 = vmatprep.subr.mxu0 0.0
    %665 = vmatpush1.msra.mxu0 0.0
    %v666 = vand.u32 %v635, 4294901760
    %667 = vmatprep.subr.mxu0 %v666
    %v668 = vand.u32 %v634, 4294901760
    %669 = vmatpush1.msra.mxu0 %v668
    %670 = vmatprep.subr.mxu0 0.0
    %671 = vmatpush2.msra.mxu0 0.0
    %672 = vmatprep.subr.mxu0 0.0
    %673 = vmatpush2.msra.mxu0 0.0
    %674 = vmatprep.subr.mxu0 0.0
    %675 = vmatpush2.msra.mxu0 0.0
    %676 = vmatprep.subr.mxu0 0.0
    %677 = vmatpush2.msra.mxu0 0.0
    %678 = vmatprep.subr.mxu0 0.0
    %679 = vmatpush2.msra.mxu0 0.0
    %680 = vmatprep.subr.mxu0 0.0
    %681 = vmatpush2.msra.mxu0 0.0
    %682 = vmatprep.subr.mxu0 0.0
    %683 = vmatpush2.msra.mxu0 0.0
    %684 = vmatprep.subr.mxu0 0.0
    %685 = vmatpush2.msra.mxu0 0.0
    %686 = vmatprep.subr.mxu0 0.0
    %687 = vmatpush2.msra.mxu0 0.0
    %688 = vmatprep.subr.mxu0 0.0
    %689 = vmatpush2.msra.mxu0 0.0
    %690 = vmatprep.subr.mxu0 0.0
    %691 = vmatpush2.msra.mxu0 0.0
    %692 = vmatprep.subr.mxu0 0.0
    %693 = vmatpush2.msra.mxu0 0.0
    %694 = vmatprep.subr.mxu0 0.0
    %695 = vmatpush2.msra.mxu0 0.0
    %696 = vmatprep.subr.mxu0 0.0
    %697 = vmatpush2.msra.mxu0 0.0
    %698 = vmatprep.subr.mxu0 0.0
    %699 = vmatpush2.msra.mxu0 0.0
    %700 = vmatprep.subr.mxu0 0.0
    %701 = vmatpush2.msra.mxu0 0.0
    %702 = vmatprep.mubr.f32.mxu0 0.0
    %v703 = vand.u32 %v165, 4294901760
    %v704 = vsub.f32 %v165, %v703
    %v705 = vand.u32 %v704, 4294901760
    %v706 = vsub.f32 %v704, %v705
    %v707 = vand.u32 %v706, 4294901760
    %708 = vmatmul.mubr.f32.gmra.mxu0 %v707
    %v709 = vpop.f32.mrf.mxu0
    %v710 = vadd.f32 1e-05, %v709
    %v711 = vpop.f32.mrf.mxu0
    %v712 = vadd.f32 1e-05, %v711
    %713 = vdwg.mxu0
    %714 = vmatprep.subr.mxu0 0.0
    %715 = vmatpush1.msra.mxu0 0.0
    %716 = vmatprep.subr.mxu0 0.0
    %717 = vmatpush1.msra.mxu0 0.0
    %718 = vmatprep.subr.mxu0 0.0
    %719 = vmatpush1.msra.mxu0 0.0
    %720 = vmatprep.subr.mxu0 0.0
    %721 = vmatpush1.msra.mxu0 0.0
    %722 = vmatprep.subr.mxu0 0.0
    %723 = vmatpush1.msra.mxu0 0.0
    %724 = vmatprep.subr.mxu0 0.0
    %725 = vmatpush1.msra.mxu0 0.0
    %726 = vmatprep.subr.mxu0 0.0
    %727 = vmatpush1.msra.mxu0 0.0
    %728 = vmatprep.subr.mxu0 0.0
    %729 = vmatpush1.msra.mxu0 0.0
    %730 = vmatprep.subr.mxu0 0.0
    %731 = vmatpush1.msra.mxu0 0.0
    %732 = vmatprep.subr.mxu0 0.0
    %733 = vmatpush1.msra.mxu0 0.0
    %734 = vmatprep.subr.mxu0 0.0
    %735 = vmatpush1.msra.mxu0 0.0
    %736 = vmatprep.subr.mxu0 0.0
    %737 = vmatpush1.msra.mxu0 0.0
    %738 = vmatprep.subr.mxu0 0.0
    %739 = vmatpush1.msra.mxu0 0.0
    %740 = vmatprep.subr.mxu0 0.0
    %741 = vmatpush1.msra.mxu0 0.0
    %742 = vmatprep.subr.mxu0 0.0
    %743 = vmatpush1.msra.mxu0 0.0
    %v744 = vand.u32 %v635, 4294901760
    %v745 = vsub.f32 %v635, %v744
    %v746 = vand.u32 %v745, 4294901760
    %v747 = vsub.f32 %v745, %v746
    %v748 = vand.u32 %v747, 4294901760
    %749 = vmatprep.subr.mxu0 %v748
    %v750 = vand.u32 %v634, 4294901760
    %v751 = vsub.f32 %v634, %v750
    %v752 = vand.u32 %v751, 4294901760
    %v753 = vsub.f32 %v751, %v752
    %v754 = vand.u32 %v753, 4294901760
    %755 = vmatpush1.msra.mxu0 %v754
    %756 = vmatprep.subr.mxu0 0.0
    %757 = vmatpush2.msra.mxu0 0.0
    %758 = vmatprep.subr.mxu0 0.0
    %759 = vmatpush2.msra.mxu0 0.0
    %760 = vmatprep.subr.mxu0 0.0
    %761 = vmatpush2.msra.mxu0 0.0
    %762 = vmatprep.subr.mxu0 0.0
    %763 = vmatpush2.msra.mxu0 0.0
    %764 = vmatprep.subr.mxu0 0.0
    %765 = vmatpush2.msra.mxu0 0.0
    %766 = vmatprep.subr.mxu0 0.0
    %767 = vmatpush2.msra.mxu0 0.0
    %768 = vmatprep.subr.mxu0 0.0
    %769 = vmatpush2.msra.mxu0 0.0
    %770 = vmatprep.subr.mxu0 0.0
    %771 = vmatpush2.msra.mxu0 0.0
    %772 = vmatprep.subr.mxu0 0.0
    %773 = vmatpush2.msra.mxu0 0.0
    %774 = vmatprep.subr.mxu0 0.0
    %775 = vmatpush2.msra.mxu0 0.0
    %776 = vmatprep.subr.mxu0 0.0
    %777 = vmatpush2.msra.mxu0 0.0
    %778 = vmatprep.subr.mxu0 0.0
    %779 = vmatpush2.msra.mxu0 0.0
    %780 = vmatprep.subr.mxu0 0.0
    %781 = vmatpush2.msra.mxu0 0.0
    %782 = vmatprep.subr.mxu0 0.0
    %783 = vmatpush2.msra.mxu0 0.0
    %784 = vmatprep.subr.mxu0 0.0
    %785 = vmatpush2.msra.mxu0 0.0
    %786 = vmatprep.subr.mxu0 0.0
    %787 = vmatpush2.msra.mxu0 0.0
    %788 = vmatprep.mubr.f32.mxu0 0.0
    %v789 = vand.u32 %v165, 4294901760
    %790 = vmatmul.mubr.f32.gmra.mxu0 %v789
    %v791 = vpop.f32.mrf.mxu0
    %v792 = vadd.f32 %v710, %v791
    %v793 = vpop.f32.mrf.mxu0
    %v794 = vadd.f32 %v712, %v793
    %795 = vdwg.mxu0
    %796 = vmatprep.subr.mxu0 0.0
    %797 = vmatpush1.msra.mxu0 0.0
    %798 = vmatprep.subr.mxu0 0.0
    %799 = vmatpush1.msra.mxu0 0.0
    %800 = vmatprep.subr.mxu0 0.0
    %801 = vmatpush1.msra.mxu0 0.0
    %802 = vmatprep.subr.mxu0 0.0
    %803 = vmatpush1.msra.mxu0 0.0
    %804 = vmatprep.subr.mxu0 0.0
    %805 = vmatpush1.msra.mxu0 0.0
    %806 = vmatprep.subr.mxu0 0.0
    %807 = vmatpush1.msra.mxu0 0.0
    %808 = vmatprep.subr.mxu0 0.0
    %809 = vmatpush1.msra.mxu0 0.0
    %810 = vmatprep.subr.mxu0 0.0
    %811 = vmatpush1.msra.mxu0 0.0
    %812 = vmatprep.subr.mxu0 0.0
    %813 = vmatpush1.msra.mxu0 0.0
    %814 = vmatprep.subr.mxu0 0.0
    %815 = vmatpush1.msra.mxu0 0.0
    %816 = vmatprep.subr.mxu0 0.0
    %817 = vmatpush1.msra.mxu0 0.0
    %818 = vmatprep.subr.mxu0 0.0
    %819 = vmatpush1.msra.mxu0 0.0
    %820 = vmatprep.subr.mxu0 0.0
    %821 = vmatpush1.msra.mxu0 0.0
    %822 = vmatprep.subr.mxu0 0.0
    %823 = vmatpush1.msra.mxu0 0.0
    %824 = vmatprep.subr.mxu0 0.0
    %825 = vmatpush1.msra.mxu0 0.0
    %v826 = vand.u32 %v635, 4294901760
    %v827 = vsub.f32 %v635, %v826
    %828 = vmatprep.subr.mxu0 %v827
    %v829 = vand.u32 %v634, 4294901760
    %v830 = vsub.f32 %v634, %v829
    %831 = vmatpush1.msra.mxu0 %v830
    %832 = vmatprep.subr.mxu0 0.0
    %833 = vmatpush2.msra.mxu0 0.0
    %834 = vmatprep.subr.mxu0 0.0
    %835 = vmatpush2.msra.mxu0 0.0
    %836 = vmatprep.subr.mxu0 0.0
    %837 = vmatpush2.msra.mxu0 0.0
    %838 = vmatprep.subr.mxu0 0.0
    %839 = vmatpush2.msra.mxu0 0.0
    %840 = vmatprep.subr.mxu0 0.0
    %841 = vmatpush2.msra.mxu0 0.0
    %842 = vmatprep.subr.mxu0 0.0
    %843 = vmatpush2.msra.mxu0 0.0
    %844 = vmatprep.subr.mxu0 0.0
    %845 = vmatpush2.msra.mxu0 0.0
    %846 = vmatprep.subr.mxu0 0.0
    %847 = vmatpush2.msra.mxu0 0.0
    %848 = vmatprep.subr.mxu0 0.0
    %849 = vmatpush2.msra.mxu0 0.0
    %850 = vmatprep.subr.mxu0 0.0
    %851 = vmatpush2.msra.mxu0 0.0
    %852 = vmatprep.subr.mxu0 0.0
    %853 = vmatpush2.msra.mxu0 0.0
    %854 = vmatprep.subr.mxu0 0.0
    %855 = vmatpush2.msra.mxu0 0.0
    %856 = vmatprep.subr.mxu0 0.0
    %857 = vmatpush2.msra.mxu0 0.0
    %858 = vmatprep.subr.mxu0 0.0
    %859 = vmatpush2.msra.mxu0 0.0
    %860 = vmatprep.subr.mxu0 0.0
    %861 = vmatpush2.msra.mxu0 0.0
    %862 = vmatprep.subr.mxu0 0.0
    %863 = vmatpush2.msra.mxu0 0.0
    %864 = vmatprep.mubr.f32.mxu0 0.0
    %v865 = vand.u32 %v165, 4294901760
    %v866 = vsub.f32 %v165, %v865
    %867 = vmatmul.mubr.f32.gmra.mxu0 %v866
    %v868 = vpop.f32.mrf.mxu0
    %v869 = vadd.f32 %v792, %v868
    %v870 = vpop.f32.mrf.mxu0
    %v871 = vadd.f32 %v794, %v870
    %872 = vdwg.mxu0
    %873 = vmatprep.subr.mxu0 0.0
    %874 = vmatpush1.msra.mxu0 0.0
    %875 = vmatprep.subr.mxu0 0.0
    %876 = vmatpush1.msra.mxu0 0.0
    %877 = vmatprep.subr.mxu0 0.0
    %878 = vmatpush1.msra.mxu0 0.0
    %879 = vmatprep.subr.mxu0 0.0
    %880 = vmatpush1.msra.mxu0 0.0
    %881 = vmatprep.subr.mxu0 0.0
    %882 = vmatpush1.msra.mxu0 0.0
    %883 = vmatprep.subr.mxu0 0.0
    %884 = vmatpush1.msra.mxu0 0.0
    %885 = vmatprep.subr.mxu0 0.0
    %886 = vmatpush1.msra.mxu0 0.0
    %887 = vmatprep.subr.mxu0 0.0
    %888 = vmatpush1.msra.mxu0 0.0
    %889 = vmatprep.subr.mxu0 0.0
    %890 = vmatpush1.msra.mxu0 0.0
    %891 = vmatprep.subr.mxu0 0.0
    %892 = vmatpush1.msra.mxu0 0.0
    %893 = vmatprep.subr.mxu0 0.0
    %894 = vmatpush1.msra.mxu0 0.0
    %895 = vmatprep.subr.mxu0 0.0
    %896 = vmatpush1.msra.mxu0 0.0
    %897 = vmatprep.subr.mxu0 0.0
    %898 = vmatpush1.msra.mxu0 0.0
    %899 = vmatprep.subr.mxu0 0.0
    %900 = vmatpush1.msra.mxu0 0.0
    %901 = vmatprep.subr.mxu0 0.0
    %902 = vmatpush1.msra.mxu0 0.0
    %v903 = vand.u32 %v635, 4294901760
    %904 = vmatprep.subr.mxu0 %v903
    %v905 = vand.u32 %v634, 4294901760
    %906 = vmatpush1.msra.mxu0 %v905
    %907 = vmatprep.subr.mxu0 0.0
    %908 = vmatpush2.msra.mxu0 0.0
    %909 = vmatprep.subr.mxu0 0.0
    %910 = vmatpush2.msra.mxu0 0.0
    %911 = vmatprep.subr.mxu0 0.0
    %912 = vmatpush2.msra.mxu0 0.0
    %913 = vmatprep.subr.mxu0 0.0
    %914 = vmatpush2.msra.mxu0 0.0
    %915 = vmatprep.subr.mxu0 0.0
    %916 = vmatpush2.msra.mxu0 0.0
    %917 = vmatprep.subr.mxu0 0.0
    %918 = vmatpush2.msra.mxu0 0.0
    %919 = vmatprep.subr.mxu0 0.0
    %920 = vmatpush2.msra.mxu0 0.0
    %921 = vmatprep.subr.mxu0 0.0
    %922 = vmatpush2.msra.mxu0 0.0
    %923 = vmatprep.subr.mxu0 0.0
    %924 = vmatpush2.msra.mxu0 0.0
    %925 = vmatprep.subr.mxu0 0.0
    %926 = vmatpush2.msra.mxu0 0.0
    %927 = vmatprep.subr.mxu0 0.0
    %928 = vmatpush2.msra.mxu0 0.0
    %929 = vmatprep.subr.mxu0 0.0
    %930 = vmatpush2.msra.mxu0 0.0
    %931 = vmatprep.subr.mxu0 0.0
    %932 = vmatpush2.msra.mxu0 0.0
    %933 = vmatprep.subr.mxu0 0.0
    %934 = vmatpush2.msra.mxu0 0.0
    %935 = vmatprep.subr.mxu0 0.0
    %936 = vmatpush2.msra.mxu0 0.0
    %937 = vmatprep.subr.mxu0 0.0
    %938 = vmatpush2.msra.mxu0 0.0
    %939 = vmatprep.mubr.f32.mxu0 0.0
    %v940 = vand.u32 %v165, 4294901760
    %v941 = vsub.f32 %v165, %v940
    %v942 = vand.u32 %v941, 4294901760
    %943 = vmatmul.mubr.f32.gmra.mxu0 %v942
    %v944 = vpop.f32.mrf.mxu0
    %v945 = vadd.f32 %v869, %v944
    %v946 = vpop.f32.mrf.mxu0
    %v947 = vadd.f32 %v871, %v946
    %948 = vdwg.mxu0
    %949 = vmatprep.subr.mxu0 0.0
    %950 = vmatpush1.msra.mxu0 0.0
    %951 = vmatprep.subr.mxu0 0.0
    %952 = vmatpush1.msra.mxu0 0.0
    %953 = vmatprep.subr.mxu0 0.0
    %954 = vmatpush1.msra.mxu0 0.0
    %955 = vmatprep.subr.mxu0 0.0
    %956 = vmatpush1.msra.mxu0 0.0
    %957 = vmatprep.subr.mxu0 0.0
    %958 = vmatpush1.msra.mxu0 0.0
    %959 = vmatprep.subr.mxu0 0.0
    %960 = vmatpush1.msra.mxu0 0.0
    %961 = vmatprep.subr.mxu0 0.0
    %962 = vmatpush1.msra.mxu0 0.0
    %963 = vmatprep.subr.mxu0 0.0
    %964 = vmatpush1.msra.mxu0 0.0
    %965 = vmatprep.subr.mxu0 0.0
    %966 = vmatpush1.msra.mxu0 0.0
    %967 = vmatprep.subr.mxu0 0.0
    %968 = vmatpush1.msra.mxu0 0.0
    %969 = vmatprep.subr.mxu0 0.0
    %970 = vmatpush1.msra.mxu0 0.0
    %971 = vmatprep.subr.mxu0 0.0
    %972 = vmatpush1.msra.mxu0 0.0
    %973 = vmatprep.subr.mxu0 0.0
    %974 = vmatpush1.msra.mxu0 0.0
    %975 = vmatprep.subr.mxu0 0.0
    %976 = vmatpush1.msra.mxu0 0.0
    %977 = vmatprep.subr.mxu0 0.0
    %978 = vmatpush1.msra.mxu0 0.0
    %v979 = vand.u32 %v635, 4294901760
    %v980 = vsub.f32 %v635, %v979
    %v981 = vand.u32 %v980, 4294901760
    %982 = vmatprep.subr.mxu0 %v981
    %v983 = vand.u32 %v634, 4294901760
    %v984 = vsub.f32 %v634, %v983
    %v985 = vand.u32 %v984, 4294901760
    %986 = vmatpush1.msra.mxu0 %v985
    %987 = vmatprep.subr.mxu0 0.0
    %988 = vmatpush2.msra.mxu0 0.0
    %989 = vmatprep.subr.mxu0 0.0
    %990 = vmatpush2.msra.mxu0 0.0
    %991 = vmatprep.subr.mxu0 0.0
    %992 = vmatpush2.msra.mxu0 0.0
    %993 = vmatprep.subr.mxu0 0.0
    %994 = vmatpush2.msra.mxu0 0.0
    %995 = vmatprep.subr.mxu0 0.0
    %996 = vmatpush2.msra.mxu0 0.0
    %997 = vmatprep.subr.mxu0 0.0
    %998 = vmatpush2.msra.mxu0 0.0
    %999 = vmatprep.subr.mxu0 0.0
    %1000 = vmatpush2.msra.mxu0 0.0
    %1001 = vmatprep.subr.mxu0 0.0
    %1002 = vmatpush2.msra.mxu0 0.0
    %1003 = vmatprep.subr.mxu0 0.0
    %1004 = vmatpush2.msra.mxu0 0.0
    %1005 = vmatprep.subr.mxu0 0.0
    %1006 = vmatpush2.msra.mxu0 0.0
    %1007 = vmatprep.subr.mxu0 0.0
    %1008 = vmatpush2.msra.mxu0 0.0
    %1009 = vmatprep.subr.mxu0 0.0
    %1010 = vmatpush2.msra.mxu0 0.0
    %1011 = vmatprep.subr.mxu0 0.0
    %1012 = vmatpush2.msra.mxu0 0.0
    %1013 = vmatprep.subr.mxu0 0.0
    %1014 = vmatpush2.msra.mxu0 0.0
    %1015 = vmatprep.subr.mxu0 0.0
    %1016 = vmatpush2.msra.mxu0 0.0
    %1017 = vmatprep.subr.mxu0 0.0
    %1018 = vmatpush2.msra.mxu0 0.0
    %1019 = vmatprep.mubr.f32.mxu0 0.0
    %v1020 = vand.u32 %v165, 4294901760
    %1021 = vmatmul.mubr.f32.gmra.mxu0 %v1020
    %v1022 = vpop.f32.mrf.mxu0
    %v1023 = vadd.f32 %v945, %v1022
    %v1024 = vpop.f32.mrf.mxu0
    %v1025 = vadd.f32 %v947, %v1024
    %1026 = vdwg.mxu0
    %1027 = vmatprep.subr.mxu0 0.0
    %1028 = vmatpush1.msra.mxu0 0.0
    %1029 = vmatprep.subr.mxu0 0.0
    %1030 = vmatpush1.msra.mxu0 0.0
    %1031 = vmatprep.subr.mxu0 0.0
    %1032 = vmatpush1.msra.mxu0 0.0
    %1033 = vmatprep.subr.mxu0 0.0
    %1034 = vmatpush1.msra.mxu0 0.0
    %1035 = vmatprep.subr.mxu0 0.0
    %1036 = vmatpush1.msra.mxu0 0.0
    %1037 = vmatprep.subr.mxu0 0.0
    %1038 = vmatpush1.msra.mxu0 0.0
    %1039 = vmatprep.subr.mxu0 0.0
    %1040 = vmatpush1.msra.mxu0 0.0
    %1041 = vmatprep.subr.mxu0 0.0
    %1042 = vmatpush1.msra.mxu0 0.0
    %1043 = vmatprep.subr.mxu0 0.0
    %1044 = vmatpush1.msra.mxu0 0.0
    %1045 = vmatprep.subr.mxu0 0.0
    %1046 = vmatpush1.msra.mxu0 0.0
    %1047 = vmatprep.subr.mxu0 0.0
    %1048 = vmatpush1.msra.mxu0 0.0
    %1049 = vmatprep.subr.mxu0 0.0
    %1050 = vmatpush1.msra.mxu0 0.0
    %1051 = vmatprep.subr.mxu0 0.0
    %1052 = vmatpush1.msra.mxu0 0.0
    %1053 = vmatprep.subr.mxu0 0.0
    %1054 = vmatpush1.msra.mxu0 0.0
    %1055 = vmatprep.subr.mxu0 0.0
    %1056 = vmatpush1.msra.mxu0 0.0
    %v1057 = vand.u32 %v635, 4294901760
    %1058 = vmatprep.subr.mxu0 %v1057
    %v1059 = vand.u32 %v634, 4294901760
    %1060 = vmatpush1.msra.mxu0 %v1059
    %1061 = vmatprep.subr.mxu0 0.0
    %1062 = vmatpush2.msra.mxu0 0.0
    %1063 = vmatprep.subr.mxu0 0.0
    %1064 = vmatpush2.msra.mxu0 0.0
    %1065 = vmatprep.subr.mxu0 0.0
    %1066 = vmatpush2.msra.mxu0 0.0
    %1067 = vmatprep.subr.mxu0 0.0
    %1068 = vmatpush2.msra.mxu0 0.0
    %1069 = vmatprep.subr.mxu0 0.0
    %1070 = vmatpush2.msra.mxu0 0.0
    %1071 = vmatprep.subr.mxu0 0.0
    %1072 = vmatpush2.msra.mxu0 0.0
    %1073 = vmatprep.subr.mxu0 0.0
    %1074 = vmatpush2.msra.mxu0 0.0
    %1075 = vmatprep.subr.mxu0 0.0
    %1076 = vmatpush2.msra.mxu0 0.0
    %1077 = vmatprep.subr.mxu0 0.0
    %1078 = vmatpush2.msra.mxu0 0.0
    %1079 = vmatprep.subr.mxu0 0.0
    %1080 = vmatpush2.msra.mxu0 0.0
    %1081 = vmatprep.subr.mxu0 0.0
    %1082 = vmatpush2.msra.mxu0 0.0
    %1083 = vmatprep.subr.mxu0 0.0
    %1084 = vmatpush2.msra.mxu0 0.0
    %1085 = vmatprep.subr.mxu0 0.0
    %1086 = vmatpush2.msra.mxu0 0.0
    %1087 = vmatprep.subr.mxu0 0.0
    %1088 = vmatpush2.msra.mxu0 0.0
    %1089 = vmatprep.subr.mxu0 0.0
    %1090 = vmatpush2.msra.mxu0 0.0
    %1091 = vmatprep.subr.mxu0 0.0
    %1092 = vmatpush2.msra.mxu0 0.0
    %1093 = vmatprep.mubr.f32.mxu0 0.0
    %v1094 = vand.u32 %v165, 4294901760
    %1095 = vmatmul.mubr.f32.gmra.mxu0 %v1094
    %v1096 = vpop.f32.mrf.mxu0
    %v1097 = vadd.f32 %v1023, %v1096
    %v1098 = vpop.f32.mrf.mxu0
    %v1099 = vadd.f32 %v1025, %v1098
    %1100 = vdwg.mxu0
    %v1101 = vrsqrt.pop %v1097
    %v1102 = vrsqrt.pop %v1099
    %v1103 = vmul.f32 %v632, %v1101
    %v1104 = vmul.f32 %v633, %v1102
    %v1105 = vld [vmem:[%s3] sm:$0xff]
    %v1106 = vld [vmem:[%s3 + $0x8] sm:$0xff]
    %v1107 = vld [vmem:[%s3 + $0x10] sm:$0xff]
    %v1108 = vld [vmem:[%s3 + $0x18] sm:$0xff]
    %1110 = vset.pattern.permute.xlu0 8
    %1111 = vperm.xlu0 %1110, %v1105
    %v1112 = vpop.permute.xlu0 %1111
    %1115 = vset.pattern.permute.xlu0 8
    %1116 = vperm.xlu0 %1115, %v1106
    %v1117 = vpop.permute.xlu0 %1116
    %1120 = vset.pattern.permute.xlu0 8
    %1121 = vperm.xlu0 %1120, %v1107
    %v1122 = vpop.permute.xlu0 %1121
    %1125 = vset.pattern.permute.xlu0 8
    %1126 = vperm.xlu0 %1125, %v1108
    %v1127 = vpop.permute.xlu0 %1126
    %v1129 = vsel %vm164, %v1105, 0
    %v1131 = vsel %vm164, %v1106, 0
    %v1133 = vsel %vm164, %v1107, 0
    %v1135 = vsel %vm164, %v1108, 0
    %1137 = vmatprep.subr.mxu0 0.0
    %1138 = vmatpush1.msra.mxu0 0.0
    %1139 = vmatprep.subr.mxu0 0.0
    %1140 = vmatpush1.msra.mxu0 0.0
    %1141 = vmatprep.subr.mxu0 0.0
    %1142 = vmatpush1.msra.mxu0 0.0
    %1143 = vmatprep.subr.mxu0 0.0
    %1144 = vmatpush1.msra.mxu0 0.0
    %1145 = vmatprep.subr.mxu0 0.0
    %1146 = vmatpush1.msra.mxu0 0.0
    %1147 = vmatprep.subr.mxu0 0.0
    %1148 = vmatpush1.msra.mxu0 0.0
    %1149 = vmatprep.subr.mxu0 0.0
    %1150 = vmatpush1.msra.mxu0 0.0
    %1151 = vmatprep.subr.mxu0 0.0
    %1152 = vmatpush1.msra.mxu0 0.0
    %1153 = vmatprep.subr.mxu0 0.0
    %1154 = vmatpush1.msra.mxu0 0.0
    %1155 = vmatprep.subr.mxu0 0.0
    %1156 = vmatpush1.msra.mxu0 0.0
    %1157 = vmatprep.subr.mxu0 0.0
    %1158 = vmatpush1.msra.mxu0 0.0
    %1159 = vmatprep.subr.mxu0 0.0
    %1160 = vmatpush1.msra.mxu0 0.0
    %1161 = vmatprep.subr.mxu0 0.0
    %1162 = vmatpush1.msra.mxu0 0.0
    %1163 = vmatprep.subr.mxu0 0.0
    %1164 = vmatpush1.msra.mxu0 0.0
    %1165 = vmatprep.subr.mxu0 0.0
    %1166 = vmatpush1.msra.mxu0 0.0
    %v1167 = vand.u32 %v1104, 4294901760
    %1168 = vmatprep.subr.mxu0 %v1167
    %v1169 = vand.u32 %v1103, 4294901760
    %1170 = vmatpush1.msra.mxu0 %v1169
    %1171 = vmatprep.subr.mxu0 0.0
    %1172 = vmatpush2.msra.mxu0 0.0
    %1173 = vmatprep.subr.mxu0 0.0
    %1174 = vmatpush2.msra.mxu0 0.0
    %1175 = vmatprep.subr.mxu0 0.0
    %1176 = vmatpush2.msra.mxu0 0.0
    %1177 = vmatprep.subr.mxu0 0.0
    %1178 = vmatpush2.msra.mxu0 0.0
    %1179 = vmatprep.subr.mxu0 0.0
    %1180 = vmatpush2.msra.mxu0 0.0
    %1181 = vmatprep.subr.mxu0 0.0
    %1182 = vmatpush2.msra.mxu0 0.0
    %1183 = vmatprep.subr.mxu0 0.0
    %1184 = vmatpush2.msra.mxu0 0.0
    %1185 = vmatprep.subr.mxu0 0.0
    %1186 = vmatpush2.msra.mxu0 0.0
    %1187 = vmatprep.subr.mxu0 0.0
    %1188 = vmatpush2.msra.mxu0 0.0
    %1189 = vmatprep.subr.mxu0 0.0
    %1190 = vmatpush2.msra.mxu0 0.0
    %1191 = vmatprep.subr.mxu0 0.0
    %1192 = vmatpush2.msra.mxu0 0.0
    %1193 = vmatprep.subr.mxu0 0.0
    %1194 = vmatpush2.msra.mxu0 0.0
    %1195 = vmatprep.subr.mxu0 0.0
    %1196 = vmatpush2.msra.mxu0 0.0
    %1197 = vmatprep.subr.mxu0 0.0
    %1198 = vmatpush2.msra.mxu0 0.0
    %1199 = vmatprep.subr.mxu0 0.0
    %1200 = vmatpush2.msra.mxu0 0.0
    %1201 = vmatprep.subr.mxu0 0.0
    %1202 = vmatpush2.msra.mxu0 0.0
    %1203 = vmatprep.mubr.f32.mxu0 0.0
    %v1204 = vand.u32 %v1129, 4294901760
    %v1205 = vsub.f32 %v1129, %v1204
    %v1206 = vand.u32 %v1205, 4294901760
    %v1207 = vsub.f32 %v1205, %v1206
    %v1208 = vand.u32 %v1207, 4294901760
    %1209 = vmatmul.mubr.f32.gmra.mxu0 %v1208
    %v1210 = vpop.f32.mrf.mxu0
    %v1211 = vadd.f32 %v1112, %v1210
    %v1212 = vpop.f32.mrf.mxu0
    %v1213 = vadd.f32 %v1112, %v1212
    %1214 = vmatprep.mubr.f32.mxu0 0.0
    %v1215 = vand.u32 %v1131, 4294901760
    %v1216 = vsub.f32 %v1131, %v1215
    %v1217 = vand.u32 %v1216, 4294901760
    %v1218 = vsub.f32 %v1216, %v1217
    %v1219 = vand.u32 %v1218, 4294901760
    %1220 = vmatmul.mubr.f32.gmra.mxu0 %v1219
    %v1221 = vpop.f32.mrf.mxu0
    %v1222 = vadd.f32 %v1117, %v1221
    %v1223 = vpop.f32.mrf.mxu0
    %v1224 = vadd.f32 %v1117, %v1223
    %1225 = vmatprep.mubr.f32.mxu0 0.0
    %v1226 = vand.u32 %v1133, 4294901760
    %v1227 = vsub.f32 %v1133, %v1226
    %v1228 = vand.u32 %v1227, 4294901760
    %v1229 = vsub.f32 %v1227, %v1228
    %v1230 = vand.u32 %v1229, 4294901760
    %1231 = vmatmul.mubr.f32.gmra.mxu0 %v1230
    %v1232 = vpop.f32.mrf.mxu0
    %v1233 = vadd.f32 %v1122, %v1232
    %v1234 = vpop.f32.mrf.mxu0
    %v1235 = vadd.f32 %v1122, %v1234
    %1236 = vmatprep.mubr.f32.mxu0 0.0
    %v1237 = vand.u32 %v1135, 4294901760
    %v1238 = vsub.f32 %v1135, %v1237
    %v1239 = vand.u32 %v1238, 4294901760
    %v1240 = vsub.f32 %v1238, %v1239
    %v1241 = vand.u32 %v1240, 4294901760
    %1242 = vmatmul.mubr.f32.gmra.mxu0 %v1241
    %v1243 = vpop.f32.mrf.mxu0
    %v1244 = vadd.f32 %v1127, %v1243
    %v1245 = vpop.f32.mrf.mxu0
    %v1246 = vadd.f32 %v1127, %v1245
    %1247 = vdwg.mxu0
    %1248 = vmatprep.subr.mxu0 0.0
    %1249 = vmatpush1.msra.mxu0 0.0
    %1250 = vmatprep.subr.mxu0 0.0
    %1251 = vmatpush1.msra.mxu0 0.0
    %1252 = vmatprep.subr.mxu0 0.0
    %1253 = vmatpush1.msra.mxu0 0.0
    %1254 = vmatprep.subr.mxu0 0.0
    %1255 = vmatpush1.msra.mxu0 0.0
    %1256 = vmatprep.subr.mxu0 0.0
    %1257 = vmatpush1.msra.mxu0 0.0
    %1258 = vmatprep.subr.mxu0 0.0
    %1259 = vmatpush1.msra.mxu0 0.0
    %1260 = vmatprep.subr.mxu0 0.0
    %1261 = vmatpush1.msra.mxu0 0.0
    %1262 = vmatprep.subr.mxu0 0.0
    %1263 = vmatpush1.msra.mxu0 0.0
    %1264 = vmatprep.subr.mxu0 0.0
    %1265 = vmatpush1.msra.mxu0 0.0
    %1266 = vmatprep.subr.mxu0 0.0
    %1267 = vmatpush1.msra.mxu0 0.0
    %1268 = vmatprep.subr.mxu0 0.0
    %1269 = vmatpush1.msra.mxu0 0.0
    %1270 = vmatprep.subr.mxu0 0.0
    %1271 = vmatpush1.msra.mxu0 0.0
    %1272 = vmatprep.subr.mxu0 0.0
    %1273 = vmatpush1.msra.mxu0 0.0
    %1274 = vmatprep.subr.mxu0 0.0
    %1275 = vmatpush1.msra.mxu0 0.0
    %1276 = vmatprep.subr.mxu0 0.0
    %1277 = vmatpush1.msra.mxu0 0.0
    %v1278 = vand.u32 %v1104, 4294901760
    %v1279 = vsub.f32 %v1104, %v1278
    %v1280 = vand.u32 %v1279, 4294901760
    %v1281 = vsub.f32 %v1279, %v1280
    %v1282 = vand.u32 %v1281, 4294901760
    %1283 = vmatprep.subr.mxu0 %v1282
    %v1284 = vand.u32 %v1103, 4294901760
    %v1285 = vsub.f32 %v1103, %v1284
    %v1286 = vand.u32 %v1285, 4294901760
    %v1287 = vsub.f32 %v1285, %v1286
    %v1288 = vand.u32 %v1287, 4294901760
    %1289 = vmatpush1.msra.mxu0 %v1288
    %1290 = vmatprep.subr.mxu0 0.0
    %1291 = vmatpush2.msra.mxu0 0.0
    %1292 = vmatprep.subr.mxu0 0.0
    %1293 = vmatpush2.msra.mxu0 0.0
    %1294 = vmatprep.subr.mxu0 0.0
    %1295 = vmatpush2.msra.mxu0 0.0
    %1296 = vmatprep.subr.mxu0 0.0
    %1297 = vmatpush2.msra.mxu0 0.0
    %1298 = vmatprep.subr.mxu0 0.0
    %1299 = vmatpush2.msra.mxu0 0.0
    %1300 = vmatprep.subr.mxu0 0.0
    %1301 = vmatpush2.msra.mxu0 0.0
    %1302 = vmatprep.subr.mxu0 0.0
    %1303 = vmatpush2.msra.mxu0 0.0
    %1304 = vmatprep.subr.mxu0 0.0
    %1305 = vmatpush2.msra.mxu0 0.0
    %1306 = vmatprep.subr.mxu0 0.0
    %1307 = vmatpush2.msra.mxu0 0.0
    %1308 = vmatprep.subr.mxu0 0.0
    %1309 = vmatpush2.msra.mxu0 0.0
    %1310 = vmatprep.subr.mxu0 0.0
    %1311 = vmatpush2.msra.mxu0 0.0
    %1312 = vmatprep.subr.mxu0 0.0
    %1313 = vmatpush2.msra.mxu0 0.0
    %1314 = vmatprep.subr.mxu0 0.0
    %1315 = vmatpush2.msra.mxu0 0.0
    %1316 = vmatprep.subr.mxu0 0.0
    %1317 = vmatpush2.msra.mxu0 0.0
    %1318 = vmatprep.subr.mxu0 0.0
    %1319 = vmatpush2.msra.mxu0 0.0
    %1320 = vmatprep.subr.mxu0 0.0
    %1321 = vmatpush2.msra.mxu0 0.0
    %1322 = vmatprep.mubr.f32.mxu0 0.0
    %v1323 = vand.u32 %v1129, 4294901760
    %1324 = vmatmul.mubr.f32.gmra.mxu0 %v1323
    %v1325 = vpop.f32.mrf.mxu0
    %v1326 = vadd.f32 %v1211, %v1325
    %v1327 = vpop.f32.mrf.mxu0
    %v1328 = vadd.f32 %v1213, %v1327
    %1329 = vmatprep.mubr.f32.mxu0 0.0
    %v1330 = vand.u32 %v1131, 4294901760
    %1331 = vmatmul.mubr.f32.gmra.mxu0 %v1330
    %v1332 = vpop.f32.mrf.mxu0
    %v1333 = vadd.f32 %v1222, %v1332
    %v1334 = vpop.f32.mrf.mxu0
    %v1335 = vadd.f32 %v1224, %v1334
    %1336 = vmatprep.mubr.f32.mxu0 0.0
    %v1337 = vand.u32 %v1133, 4294901760
    %1338 = vmatmul.mubr.f32.gmra.mxu0 %v1337
    %v1339 = vpop.f32.mrf.mxu0
    %v1340 = vadd.f32 %v1233, %v1339
    %v1341 = vpop.f32.mrf.mxu0
    %v1342 = vadd.f32 %v1235, %v1341
    %1343 = vmatprep.mubr.f32.mxu0 0.0
    %v1344 = vand.u32 %v1135, 4294901760
    %1345 = vmatmul.mubr.f32.gmra.mxu0 %v1344
    %v1346 = vpop.f32.mrf.mxu0
    %v1347 = vadd.f32 %v1244, %v1346
    %v1348 = vpop.f32.mrf.mxu0
    %v1349 = vadd.f32 %v1246, %v1348
    %1350 = vdwg.mxu0
    %1351 = vmatprep.subr.mxu0 0.0
    %1352 = vmatpush1.msra.mxu0 0.0
    %1353 = vmatprep.subr.mxu0 0.0
    %1354 = vmatpush1.msra.mxu0 0.0
    %1355 = vmatprep.subr.mxu0 0.0
    %1356 = vmatpush1.msra.mxu0 0.0
    %1357 = vmatprep.subr.mxu0 0.0
    %1358 = vmatpush1.msra.mxu0 0.0
    %1359 = vmatprep.subr.mxu0 0.0
    %1360 = vmatpush1.msra.mxu0 0.0
    %1361 = vmatprep.subr.mxu0 0.0
    %1362 = vmatpush1.msra.mxu0 0.0
    %1363 = vmatprep.subr.mxu0 0.0
    %1364 = vmatpush1.msra.mxu0 0.0
    %1365 = vmatprep.subr.mxu0 0.0
    %1366 = vmatpush1.msra.mxu0 0.0
    %1367 = vmatprep.subr.mxu0 0.0
    %1368 = vmatpush1.msra.mxu0 0.0
    %1369 = vmatprep.subr.mxu0 0.0
    %1370 = vmatpush1.msra.mxu0 0.0
    %1371 = vmatprep.subr.mxu0 0.0
    %1372 = vmatpush1.msra.mxu0 0.0
    %1373 = vmatprep.subr.mxu0 0.0
    %1374 = vmatpush1.msra.mxu0 0.0
    %1375 = vmatprep.subr.mxu0 0.0
    %1376 = vmatpush1.msra.mxu0 0.0
    %1377 = vmatprep.subr.mxu0 0.0
    %1378 = vmatpush1.msra.mxu0 0.0
    %1379 = vmatprep.subr.mxu0 0.0
    %1380 = vmatpush1.msra.mxu0 0.0
    %v1381 = vand.u32 %v1104, 4294901760
    %v1382 = vsub.f32 %v1104, %v1381
    %1383 = vmatprep.subr.mxu0 %v1382
    %v1384 = vand.u32 %v1103, 4294901760
    %v1385 = vsub.f32 %v1103, %v1384
    %1386 = vmatpush1.msra.mxu0 %v1385
    %1387 = vmatprep.subr.mxu0 0.0
    %1388 = vmatpush2.msra.mxu0 0.0
    %1389 = vmatprep.subr.mxu0 0.0
    %1390 = vmatpush2.msra.mxu0 0.0
    %1391 = vmatprep.subr.mxu0 0.0
    %1392 = vmatpush2.msra.mxu0 0.0
    %1393 = vmatprep.subr.mxu0 0.0
    %1394 = vmatpush2.msra.mxu0 0.0
    %1395 = vmatprep.subr.mxu0 0.0
    %1396 = vmatpush2.msra.mxu0 0.0
    %1397 = vmatprep.subr.mxu0 0.0
    %1398 = vmatpush2.msra.mxu0 0.0
    %1399 = vmatprep.subr.mxu0 0.0
    %1400 = vmatpush2.msra.mxu0 0.0
    %1401 = vmatprep.subr.mxu0 0.0
    %1402 = vmatpush2.msra.mxu0 0.0
    %1403 = vmatprep.subr.mxu0 0.0
    %1404 = vmatpush2.msra.mxu0 0.0
    %1405 = vmatprep.subr.mxu0 0.0
    %1406 = vmatpush2.msra.mxu0 0.0
    %1407 = vmatprep.subr.mxu0 0.0
    %1408 = vmatpush2.msra.mxu0 0.0
    %1409 = vmatprep.subr.mxu0 0.0
    %1410 = vmatpush2.msra.mxu0 0.0
    %1411 = vmatprep.subr.mxu0 0.0
    %1412 = vmatpush2.msra.mxu0 0.0
    %1413 = vmatprep.subr.mxu0 0.0
    %1414 = vmatpush2.msra.mxu0 0.0
    %1415 = vmatprep.subr.mxu0 0.0
    %1416 = vmatpush2.msra.mxu0 0.0
    %1417 = vmatprep.subr.mxu0 0.0
    %1418 = vmatpush2.msra.mxu0 0.0
    %1419 = vmatprep.mubr.f32.mxu0 0.0
    %v1420 = vand.u32 %v1129, 4294901760
    %v1421 = vsub.f32 %v1129, %v1420
    %1422 = vmatmul.mubr.f32.gmra.mxu0 %v1421
    %v1423 = vpop.f32.mrf.mxu0
    %v1424 = vadd.f32 %v1326, %v1423
    %v1425 = vpop.f32.mrf.mxu0
    %v1426 = vadd.f32 %v1328, %v1425
    %1427 = vmatprep.mubr.f32.mxu0 0.0
    %v1428 = vand.u32 %v1131, 4294901760
    %v1429 = vsub.f32 %v1131, %v1428
    %1430 = vmatmul.mubr.f32.gmra.mxu0 %v1429
    %v1431 = vpop.f32.mrf.mxu0
    %v1432 = vadd.f32 %v1333, %v1431
    %v1433 = vpop.f32.mrf.mxu0
    %v1434 = vadd.f32 %v1335, %v1433
    %1435 = vmatprep.mubr.f32.mxu0 0.0
    %v1436 = vand.u32 %v1133, 4294901760
    %v1437 = vsub.f32 %v1133, %v1436
    %1438 = vmatmul.mubr.f32.gmra.mxu0 %v1437
    %v1439 = vpop.f32.mrf.mxu0
    %v1440 = vadd.f32 %v1340, %v1439
    %v1441 = vpop.f32.mrf.mxu0
    %v1442 = vadd.f32 %v1342, %v1441
    %1443 = vmatprep.mubr.f32.mxu0 0.0
    %v1444 = vand.u32 %v1135, 4294901760
    %v1445 = vsub.f32 %v1135, %v1444
    %1446 = vmatmul.mubr.f32.gmra.mxu0 %v1445
    %v1447 = vpop.f32.mrf.mxu0
    %v1448 = vadd.f32 %v1347, %v1447
    %v1449 = vpop.f32.mrf.mxu0
    %v1450 = vadd.f32 %v1349, %v1449
    %1451 = vdwg.mxu0
    %1452 = vmatprep.subr.mxu0 0.0
    %1453 = vmatpush1.msra.mxu0 0.0
    %1454 = vmatprep.subr.mxu0 0.0
    %1455 = vmatpush1.msra.mxu0 0.0
    %1456 = vmatprep.subr.mxu0 0.0
    %1457 = vmatpush1.msra.mxu0 0.0
    %1458 = vmatprep.subr.mxu0 0.0
    %1459 = vmatpush1.msra.mxu0 0.0
    %1460 = vmatprep.subr.mxu0 0.0
    %1461 = vmatpush1.msra.mxu0 0.0
    %1462 = vmatprep.subr.mxu0 0.0
    %1463 = vmatpush1.msra.mxu0 0.0
    %1464 = vmatprep.subr.mxu0 0.0
    %1465 = vmatpush1.msra.mxu0 0.0
    %1466 = vmatprep.subr.mxu0 0.0
    %1467 = vmatpush1.msra.mxu0 0.0
    %1468 = vmatprep.subr.mxu0 0.0
    %1469 = vmatpush1.msra.mxu0 0.0
    %1470 = vmatprep.subr.mxu0 0.0
    %1471 = vmatpush1.msra.mxu0 0.0
    %1472 = vmatprep.subr.mxu0 0.0
    %1473 = vmatpush1.msra.mxu0 0.0
    %1474 = vmatprep.subr.mxu0 0.0
    %1475 = vmatpush1.msra.mxu0 0.0
    %1476 = vmatprep.subr.mxu0 0.0
    %1477 = vmatpush1.msra.mxu0 0.0
    %1478 = vmatprep.subr.mxu0 0.0
    %1479 = vmatpush1.msra.mxu0 0.0
    %1480 = vmatprep.subr.mxu0 0.0
    %1481 = vmatpush1.msra.mxu0 0.0
    %v1482 = vand.u32 %v1104, 4294901760
    %1483 = vmatprep.subr.mxu0 %v1482
    %v1484 = vand.u32 %v1103, 4294901760
    %1485 = vmatpush1.msra.mxu0 %v1484
    %1486 = vmatprep.subr.mxu0 0.0
    %1487 = vmatpush2.msra.mxu0 0.0
    %1488 = vmatprep.subr.mxu0 0.0
    %1489 = vmatpush2.msra.mxu0 0.0
    %1490 = vmatprep.subr.mxu0 0.0
    %1491 = vmatpush2.msra.mxu0 0.0
    %1492 = vmatprep.subr.mxu0 0.0
    %1493 = vmatpush2.msra.mxu0 0.0
    %1494 = vmatprep.subr.mxu0 0.0
    %1495 = vmatpush2.msra.mxu0 0.0
    %1496 = vmatprep.subr.mxu0 0.0
    %1497 = vmatpush2.msra.mxu0 0.0
    %1498 = vmatprep.subr.mxu0 0.0
    %1499 = vmatpush2.msra.mxu0 0.0
    %1500 = vmatprep.subr.mxu0 0.0
    %1501 = vmatpush2.msra.mxu0 0.0
    %1502 = vmatprep.subr.mxu0 0.0
    %1503 = vmatpush2.msra.mxu0 0.0
    %1504 = vmatprep.subr.mxu0 0.0
    %1505 = vmatpush2.msra.mxu0 0.0
    %1506 = vmatprep.subr.mxu0 0.0
    %1507 = vmatpush2.msra.mxu0 0.0
    %1508 = vmatprep.subr.mxu0 0.0
    %1509 = vmatpush2.msra.mxu0 0.0
    %1510 = vmatprep.subr.mxu0 0.0
    %1511 = vmatpush2.msra.mxu0 0.0
    %1512 = vmatprep.subr.mxu0 0.0
    %1513 = vmatpush2.msra.mxu0 0.0
    %1514 = vmatprep.subr.mxu0 0.0
    %1515 = vmatpush2.msra.mxu0 0.0
    %1516 = vmatprep.subr.mxu0 0.0
    %1517 = vmatpush2.msra.mxu0 0.0
    %1518 = vmatprep.mubr.f32.mxu0 0.0
    %v1519 = vand.u32 %v1129, 4294901760
    %v1520 = vsub.f32 %v1129, %v1519
    %v1521 = vand.u32 %v1520, 4294901760
    %1522 = vmatmul.mubr.f32.gmra.mxu0 %v1521
    %v1523 = vpop.f32.mrf.mxu0
    %v1524 = vadd.f32 %v1424, %v1523
    %v1525 = vpop.f32.mrf.mxu0
    %v1526 = vadd.f32 %v1426, %v1525
    %1527 = vmatprep.mubr.f32.mxu0 0.0
    %v1528 = vand.u32 %v1131, 4294901760
    %v1529 = vsub.f32 %v1131, %v1528
    %v1530 = vand.u32 %v1529, 4294901760
    %1531 = vmatmul.mubr.f32.gmra.mxu0 %v1530
    %v1532 = vpop.f32.mrf.mxu0
    %v1533 = vadd.f32 %v1432, %v1532
    %v1534 = vpop.f32.mrf.mxu0
    %v1535 = vadd.f32 %v1434, %v1534
    %1536 = vmatprep.mubr.f32.mxu0 0.0
    %v1537 = vand.u32 %v1133, 4294901760
    %v1538 = vsub.f32 %v1133, %v1537
    %v1539 = vand.u32 %v1538, 4294901760
    %1540 = vmatmul.mubr.f32.gmra.mxu0 %v1539
    %v1541 = vpop.f32.mrf.mxu0
    %v1542 = vadd.f32 %v1440, %v1541
    %v1543 = vpop.f32.mrf.mxu0
    %v1544 = vadd.f32 %v1442, %v1543
    %1545 = vmatprep.mubr.f32.mxu0 0.0
    %v1546 = vand.u32 %v1135, 4294901760
    %v1547 = vsub.f32 %v1135, %v1546
    %v1548 = vand.u32 %v1547, 4294901760
    %1549 = vmatmul.mubr.f32.gmra.mxu0 %v1548
    %v1550 = vpop.f32.mrf.mxu0
    %v1551 = vadd.f32 %v1448, %v1550
    %v1552 = vpop.f32.mrf.mxu0
    %v1553 = vadd.f32 %v1450, %v1552
    %1554 = vdwg.mxu0
    %1555 = vmatprep.subr.mxu0 0.0
    %1556 = vmatpush1.msra.mxu0 0.0
    %1557 = vmatprep.subr.mxu0 0.0
    %1558 = vmatpush1.msra.mxu0 0.0
    %1559 = vmatprep.subr.mxu0 0.0
    %1560 = vmatpush1.msra.mxu0 0.0
    %1561 = vmatprep.subr.mxu0 0.0
    %1562 = vmatpush1.msra.mxu0 0.0
    %1563 = vmatprep.subr.mxu0 0.0
    %1564 = vmatpush1.msra.mxu0 0.0
    %1565 = vmatprep.subr.mxu0 0.0
    %1566 = vmatpush1.msra.mxu0 0.0
    %1567 = vmatprep.subr.mxu0 0.0
    %1568 = vmatpush1.msra.mxu0 0.0
    %1569 = vmatprep.subr.mxu0 0.0
    %1570 = vmatpush1.msra.mxu0 0.0
    %1571 = vmatprep.subr.mxu0 0.0
    %1572 = vmatpush1.msra.mxu0 0.0
    %1573 = vmatprep.subr.mxu0 0.0
    %1574 = vmatpush1.msra.mxu0 0.0
    %1575 = vmatprep.subr.mxu0 0.0
    %1576 = vmatpush1.msra.mxu0 0.0
    %1577 = vmatprep.subr.mxu0 0.0
    %1578 = vmatpush1.msra.mxu0 0.0
    %1579 = vmatprep.subr.mxu0 0.0
    %1580 = vmatpush1.msra.mxu0 0.0
    %1581 = vmatprep.subr.mxu0 0.0
    %1582 = vmatpush1.msra.mxu0 0.0
    %1583 = vmatprep.subr.mxu0 0.0
    %1584 = vmatpush1.msra.mxu0 0.0
    %v1585 = vand.u32 %v1104, 4294901760
    %v1586 = vsub.f32 %v1104, %v1585
    %v1587 = vand.u32 %v1586, 4294901760
    %1588 = vmatprep.subr.mxu0 %v1587
    %v1589 = vand.u32 %v1103, 4294901760
    %v1590 = vsub.f32 %v1103, %v1589
    %v1591 = vand.u32 %v1590, 4294901760
    %1592 = vmatpush1.msra.mxu0 %v1591
    %1593 = vmatprep.subr.mxu0 0.0
    %1594 = vmatpush2.msra.mxu0 0.0
    %1595 = vmatprep.subr.mxu0 0.0
    %1596 = vmatpush2.msra.mxu0 0.0
    %1597 = vmatprep.subr.mxu0 0.0
    %1598 = vmatpush2.msra.mxu0 0.0
    %1599 = vmatprep.subr.mxu0 0.0
    %1600 = vmatpush2.msra.mxu0 0.0
    %1601 = vmatprep.subr.mxu0 0.0
    %1602 = vmatpush2.msra.mxu0 0.0
    %1603 = vmatprep.subr.mxu0 0.0
    %1604 = vmatpush2.msra.mxu0 0.0
    %1605 = vmatprep.subr.mxu0 0.0
    %1606 = vmatpush2.msra.mxu0 0.0
    %1607 = vmatprep.subr.mxu0 0.0
    %1608 = vmatpush2.msra.mxu0 0.0
    %1609 = vmatprep.subr.mxu0 0.0
    %1610 = vmatpush2.msra.mxu0 0.0
    %1611 = vmatprep.subr.mxu0 0.0
    %1612 = vmatpush2.msra.mxu0 0.0
    %1613 = vmatprep.subr.mxu0 0.0
    %1614 = vmatpush2.msra.mxu0 0.0
    %1615 = vmatprep.subr.mxu0 0.0
    %1616 = vmatpush2.msra.mxu0 0.0
    %1617 = vmatprep.subr.mxu0 0.0
    %1618 = vmatpush2.msra.mxu0 0.0
    %1619 = vmatprep.subr.mxu0 0.0
    %1620 = vmatpush2.msra.mxu0 0.0
    %1621 = vmatprep.subr.mxu0 0.0
    %1622 = vmatpush2.msra.mxu0 0.0
    %1623 = vmatprep.subr.mxu0 0.0
    %1624 = vmatpush2.msra.mxu0 0.0
    %1625 = vmatprep.mubr.f32.mxu0 0.0
    %v1626 = vand.u32 %v1129, 4294901760
    %1627 = vmatmul.mubr.f32.gmra.mxu0 %v1626
    %v1628 = vpop.f32.mrf.mxu0
    %v1629 = vadd.f32 %v1524, %v1628
    %v1630 = vpop.f32.mrf.mxu0
    %v1631 = vadd.f32 %v1526, %v1630
    %1632 = vmatprep.mubr.f32.mxu0 0.0
    %v1633 = vand.u32 %v1131, 4294901760
    %1634 = vmatmul.mubr.f32.gmra.mxu0 %v1633
    %v1635 = vpop.f32.mrf.mxu0
    %v1636 = vadd.f32 %v1533, %v1635
    %v1637 = vpop.f32.mrf.mxu0
    %v1638 = vadd.f32 %v1535, %v1637
    %1639 = vmatprep.mubr.f32.mxu0 0.0
    %v1640 = vand.u32 %v1133, 4294901760
    %1641 = vmatmul.mubr.f32.gmra.mxu0 %v1640
    %v1642 = vpop.f32.mrf.mxu0
    %v1643 = vadd.f32 %v1542, %v1642
    %v1644 = vpop.f32.mrf.mxu0
    %v1645 = vadd.f32 %v1544, %v1644
    %1646 = vmatprep.mubr.f32.mxu0 0.0
    %v1647 = vand.u32 %v1135, 4294901760
    %1648 = vmatmul.mubr.f32.gmra.mxu0 %v1647
    %v1649 = vpop.f32.mrf.mxu0
    %v1650 = vadd.f32 %v1551, %v1649
    %v1651 = vpop.f32.mrf.mxu0
    %v1652 = vadd.f32 %v1553, %v1651
    %1653 = vdwg.mxu0
    %1654 = vmatprep.subr.mxu0 0.0
    %1655 = vmatpush1.msra.mxu0 0.0
    %1656 = vmatprep.subr.mxu0 0.0
    %1657 = vmatpush1.msra.mxu0 0.0
    %1658 = vmatprep.subr.mxu0 0.0
    %1659 = vmatpush1.msra.mxu0 0.0
    %1660 = vmatprep.subr.mxu0 0.0
    %1661 = vmatpush1.msra.mxu0 0.0
    %1662 = vmatprep.subr.mxu0 0.0
    %1663 = vmatpush1.msra.mxu0 0.0
    %1664 = vmatprep.subr.mxu0 0.0
    %1665 = vmatpush1.msra.mxu0 0.0
    %1666 = vmatprep.subr.mxu0 0.0
    %1667 = vmatpush1.msra.mxu0 0.0
    %1668 = vmatprep.subr.mxu0 0.0
    %1669 = vmatpush1.msra.mxu0 0.0
    %1670 = vmatprep.subr.mxu0 0.0
    %1671 = vmatpush1.msra.mxu0 0.0
    %1672 = vmatprep.subr.mxu0 0.0
    %1673 = vmatpush1.msra.mxu0 0.0
    %1674 = vmatprep.subr.mxu0 0.0
    %1675 = vmatpush1.msra.mxu0 0.0
    %1676 = vmatprep.subr.mxu0 0.0
    %1677 = vmatpush1.msra.mxu0 0.0
    %1678 = vmatprep.subr.mxu0 0.0
    %1679 = vmatpush1.msra.mxu0 0.0
    %1680 = vmatprep.subr.mxu0 0.0
    %1681 = vmatpush1.msra.mxu0 0.0
    %1682 = vmatprep.subr.mxu0 0.0
    %1683 = vmatpush1.msra.mxu0 0.0
    %v1684 = vand.u32 %v1104, 4294901760
    %1685 = vmatprep.subr.mxu0 %v1684
    %v1686 = vand.u32 %v1103, 4294901760
    %1687 = vmatpush1.msra.mxu0 %v1686
    %1688 = vmatprep.subr.mxu0 0.0
    %1689 = vmatpush2.msra.mxu0 0.0
    %1690 = vmatprep.subr.mxu0 0.0
    %1691 = vmatpush2.msra.mxu0 0.0
    %1692 = vmatprep.subr.mxu0 0.0
    %1693 = vmatpush2.msra.mxu0 0.0
    %1694 = vmatprep.subr.mxu0 0.0
    %1695 = vmatpush2.msra.mxu0 0.0
    %1696 = vmatprep.subr.mxu0 0.0
    %1697 = vmatpush2.msra.mxu0 0.0
    %1698 = vmatprep.subr.mxu0 0.0
    %1699 = vmatpush2.msra.mxu0 0.0
    %1700 = vmatprep.subr.mxu0 0.0
    %1701 = vmatpush2.msra.mxu0 0.0
    %1702 = vmatprep.subr.mxu0 0.0
    %1703 = vmatpush2.msra.mxu0 0.0
    %1704 = vmatprep.subr.mxu0 0.0
    %1705 = vmatpush2.msra.mxu0 0.0
    %1706 = vmatprep.subr.mxu0 0.0
    %1707 = vmatpush2.msra.mxu0 0.0
    %1708 = vmatprep.subr.mxu0 0.0
    %1709 = vmatpush2.msra.mxu0 0.0
    %1710 = vmatprep.subr.mxu0 0.0
    %1711 = vmatpush2.msra.mxu0 0.0
    %1712 = vmatprep.subr.mxu0 0.0
    %1713 = vmatpush2.msra.mxu0 0.0
    %1714 = vmatprep.subr.mxu0 0.0
    %1715 = vmatpush2.msra.mxu0 0.0
    %1716 = vmatprep.subr.mxu0 0.0
    %1717 = vmatpush2.msra.mxu0 0.0
    %1718 = vmatprep.subr.mxu0 0.0
    %1719 = vmatpush2.msra.mxu0 0.0
    %1720 = vmatprep.mubr.f32.mxu0 0.0
    %v1721 = vand.u32 %v1129, 4294901760
    %1722 = vmatmul.mubr.f32.gmra.mxu0 %v1721
    %v1723 = vpop.f32.mrf.mxu0
    %v1724 = vadd.f32 %v1629, %v1723
    %v1725 = vpop.f32.mrf.mxu0
    %v1726 = vadd.f32 %v1631, %v1725
    %1727 = vmatprep.mubr.f32.mxu0 0.0
    %v1728 = vand.u32 %v1131, 4294901760
    %1729 = vmatmul.mubr.f32.gmra.mxu0 %v1728
    %v1730 = vpop.f32.mrf.mxu0
    %v1731 = vadd.f32 %v1636, %v1730
    %v1732 = vpop.f32.mrf.mxu0
    %v1733 = vadd.f32 %v1638, %v1732
    %1734 = vmatprep.mubr.f32.mxu0 0.0
    %v1735 = vand.u32 %v1133, 4294901760
    %1736 = vmatmul.mubr.f32.gmra.mxu0 %v1735
    %v1737 = vpop.f32.mrf.mxu0
    %v1738 = vadd.f32 %v1643, %v1737
    %v1739 = vpop.f32.mrf.mxu0
    %v1740 = vadd.f32 %v1645, %v1739
    %1741 = vmatprep.mubr.f32.mxu0 0.0
    %v1742 = vand.u32 %v1135, 4294901760
    %1743 = vmatmul.mubr.f32.gmra.mxu0 %v1742
    %v1744 = vpop.f32.mrf.mxu0
    %v1745 = vadd.f32 %v1650, %v1744
    %v1746 = vpop.f32.mrf.mxu0
    %v1747 = vadd.f32 %v1652, %v1746
    %1748 = vdwg.mxu0
    %v1749 = vmax.f32 %v1724, 0.0
    %v1750 = vmax.f32 %v1726, 0.0
    %v1751 = vmax.f32 %v1731, 0.0
    %v1752 = vmax.f32 %v1733, 0.0
    %v1753 = vmax.f32 %v1738, 0.0
    %v1754 = vmax.f32 %v1740, 0.0
    %v1755 = vmax.f32 %v1745, 0.0
    %v1756 = vmax.f32 %v1747, 0.0
    %1757 = vset.pattern.permute.xlu0 41
    %1758 = vperm.xlu0 %1757, %v154
    %v1759 = vpop.permute.xlu0 %1758
    %vm1761 = vcmask 261120
    %v1762 = vsel %vm1761, %v154, 0
    %1764 = vmatprep.subr.mxu0 0.0
    %1765 = vmatpush1.msra.mxu0 0.0
    %1766 = vmatprep.subr.mxu0 0.0
    %1767 = vmatpush1.msra.mxu0 0.0
    %1768 = vmatprep.subr.mxu0 0.0
    %1769 = vmatpush1.msra.mxu0 0.0
    %1770 = vmatprep.subr.mxu0 0.0
    %1771 = vmatpush1.msra.mxu0 0.0
    %1772 = vmatprep.subr.mxu0 0.0
    %1773 = vmatpush1.msra.mxu0 0.0
    %1774 = vmatprep.subr.mxu0 0.0
    %1775 = vmatpush1.msra.mxu0 0.0
    %1776 = vmatprep.subr.mxu0 0.0
    %1777 = vmatpush1.msra.mxu0 0.0
    %1778 = vmatprep.subr.mxu0 0.0
    %1779 = vmatpush1.msra.mxu0 0.0
    %1780 = vmatprep.subr.mxu0 0.0
    %1781 = vmatpush1.msra.mxu0 0.0
    %1782 = vmatprep.subr.mxu0 0.0
    %1783 = vmatpush1.msra.mxu0 0.0
    %1784 = vmatprep.subr.mxu0 0.0
    %1785 = vmatpush1.msra.mxu0 0.0
    %1786 = vmatprep.subr.mxu0 0.0
    %1787 = vmatpush1.msra.mxu0 0.0
    %v1788 = vand.u32 %v1756, 4294901760
    %1789 = vmatprep.subr.mxu0 %v1788
    %v1790 = vand.u32 %v1755, 4294901760
    %1791 = vmatpush1.msra.mxu0 %v1790
    %v1792 = vand.u32 %v1754, 4294901760
    %1793 = vmatprep.subr.mxu0 %v1792
    %v1794 = vand.u32 %v1753, 4294901760
    %1795 = vmatpush1.msra.mxu0 %v1794
    %v1796 = vand.u32 %v1752, 4294901760
    %1797 = vmatprep.subr.mxu0 %v1796
    %v1798 = vand.u32 %v1751, 4294901760
    %1799 = vmatpush1.msra.mxu0 %v1798
    %v1800 = vand.u32 %v1750, 4294901760
    %1801 = vmatprep.subr.mxu0 %v1800
    %v1802 = vand.u32 %v1749, 4294901760
    %1803 = vmatpush1.msra.mxu0 %v1802
    %1804 = vmatprep.subr.mxu0 0.0
    %1805 = vmatpush2.msra.mxu0 0.0
    %1806 = vmatprep.subr.mxu0 0.0
    %1807 = vmatpush2.msra.mxu0 0.0
    %1808 = vmatprep.subr.mxu0 0.0
    %1809 = vmatpush2.msra.mxu0 0.0
    %1810 = vmatprep.subr.mxu0 0.0
    %1811 = vmatpush2.msra.mxu0 0.0
    %1812 = vmatprep.subr.mxu0 0.0
    %1813 = vmatpush2.msra.mxu0 0.0
    %1814 = vmatprep.subr.mxu0 0.0
    %1815 = vmatpush2.msra.mxu0 0.0
    %1816 = vmatprep.subr.mxu0 0.0
    %1817 = vmatpush2.msra.mxu0 0.0
    %1818 = vmatprep.subr.mxu0 0.0
    %1819 = vmatpush2.msra.mxu0 0.0
    %1820 = vmatprep.subr.mxu0 0.0
    %1821 = vmatpush2.msra.mxu0 0.0
    %1822 = vmatprep.subr.mxu0 0.0
    %1823 = vmatpush2.msra.mxu0 0.0
    %1824 = vmatprep.subr.mxu0 0.0
    %1825 = vmatpush2.msra.mxu0 0.0
    %1826 = vmatprep.subr.mxu0 0.0
    %1827 = vmatpush2.msra.mxu0 0.0
    %1828 = vmatprep.subr.mxu0 0.0
    %1829 = vmatpush2.msra.mxu0 0.0
    %1830 = vmatprep.subr.mxu0 0.0
    %1831 = vmatpush2.msra.mxu0 0.0
    %1832 = vmatprep.subr.mxu0 0.0
    %1833 = vmatpush2.msra.mxu0 0.0
    %1834 = vmatprep.subr.mxu0 0.0
    %1835 = vmatpush2.msra.mxu0 0.0
    %1836 = vmatprep.mubr.f32.mxu0 0.0
    %v1837 = vand.u32 %v1762, 4294901760
    %v1838 = vsub.f32 %v1762, %v1837
    %v1839 = vand.u32 %v1838, 4294901760
    %v1840 = vsub.f32 %v1838, %v1839
    %v1841 = vand.u32 %v1840, 4294901760
    %1842 = vmatmul.mubr.f32.gmra.mxu0 %v1841
    %v1843 = vpop.f32.mrf.mxu0
    %v1844 = vadd.f32 %v1759, %v1843
    %v1845 = vpop.f32.mrf.mxu0
    %v1846 = vadd.f32 %v1759, %v1845
    %1847 = vdwg.mxu0
    %1848 = vmatprep.subr.mxu0 0.0
    %1849 = vmatpush1.msra.mxu0 0.0
    %1850 = vmatprep.subr.mxu0 0.0
    %1851 = vmatpush1.msra.mxu0 0.0
    %1852 = vmatprep.subr.mxu0 0.0
    %1853 = vmatpush1.msra.mxu0 0.0
    %1854 = vmatprep.subr.mxu0 0.0
    %1855 = vmatpush1.msra.mxu0 0.0
    %1856 = vmatprep.subr.mxu0 0.0
    %1857 = vmatpush1.msra.mxu0 0.0
    %1858 = vmatprep.subr.mxu0 0.0
    %1859 = vmatpush1.msra.mxu0 0.0
    %1860 = vmatprep.subr.mxu0 0.0
    %1861 = vmatpush1.msra.mxu0 0.0
    %1862 = vmatprep.subr.mxu0 0.0
    %1863 = vmatpush1.msra.mxu0 0.0
    %1864 = vmatprep.subr.mxu0 0.0
    %1865 = vmatpush1.msra.mxu0 0.0
    %1866 = vmatprep.subr.mxu0 0.0
    %1867 = vmatpush1.msra.mxu0 0.0
    %1868 = vmatprep.subr.mxu0 0.0
    %1869 = vmatpush1.msra.mxu0 0.0
    %1870 = vmatprep.subr.mxu0 0.0
    %1871 = vmatpush1.msra.mxu0 0.0
    %v1872 = vand.u32 %v1756, 4294901760
    %v1873 = vsub.f32 %v1756, %v1872
    %v1874 = vand.u32 %v1873, 4294901760
    %v1875 = vsub.f32 %v1873, %v1874
    %v1876 = vand.u32 %v1875, 4294901760
    %1877 = vmatprep.subr.mxu0 %v1876
    %v1878 = vand.u32 %v1755, 4294901760
    %v1879 = vsub.f32 %v1755, %v1878
    %v1880 = vand.u32 %v1879, 4294901760
    %v1881 = vsub.f32 %v1879, %v1880
    %v1882 = vand.u32 %v1881, 4294901760
    %1883 = vmatpush1.msra.mxu0 %v1882
    %v1884 = vand.u32 %v1754, 4294901760
    %v1885 = vsub.f32 %v1754, %v1884
    %v1886 = vand.u32 %v1885, 4294901760
    %v1887 = vsub.f32 %v1885, %v1886
    %v1888 = vand.u32 %v1887, 4294901760
    %1889 = vmatprep.subr.mxu0 %v1888
    %v1890 = vand.u32 %v1753, 4294901760
    %v1891 = vsub.f32 %v1753, %v1890
    %v1892 = vand.u32 %v1891, 4294901760
    %v1893 = vsub.f32 %v1891, %v1892
    %v1894 = vand.u32 %v1893, 4294901760
    %1895 = vmatpush1.msra.mxu0 %v1894
    %v1896 = vand.u32 %v1752, 4294901760
    %v1897 = vsub.f32 %v1752, %v1896
    %v1898 = vand.u32 %v1897, 4294901760
    %v1899 = vsub.f32 %v1897, %v1898
    %v1900 = vand.u32 %v1899, 4294901760
    %1901 = vmatprep.subr.mxu0 %v1900
    %v1902 = vand.u32 %v1751, 4294901760
    %v1903 = vsub.f32 %v1751, %v1902
    %v1904 = vand.u32 %v1903, 4294901760
    %v1905 = vsub.f32 %v1903, %v1904
    %v1906 = vand.u32 %v1905, 4294901760
    %1907 = vmatpush1.msra.mxu0 %v1906
    %v1908 = vand.u32 %v1750, 4294901760
    %v1909 = vsub.f32 %v1750, %v1908
    %v1910 = vand.u32 %v1909, 4294901760
    %v1911 = vsub.f32 %v1909, %v1910
    %v1912 = vand.u32 %v1911, 4294901760
    %1913 = vmatprep.subr.mxu0 %v1912
    %v1914 = vand.u32 %v1749, 4294901760
    %v1915 = vsub.f32 %v1749, %v1914
    %v1916 = vand.u32 %v1915, 4294901760
    %v1917 = vsub.f32 %v1915, %v1916
    %v1918 = vand.u32 %v1917, 4294901760
    %1919 = vmatpush1.msra.mxu0 %v1918
    %1920 = vmatprep.subr.mxu0 0.0
    %1921 = vmatpush2.msra.mxu0 0.0
    %1922 = vmatprep.subr.mxu0 0.0
    %1923 = vmatpush2.msra.mxu0 0.0
    %1924 = vmatprep.subr.mxu0 0.0
    %1925 = vmatpush2.msra.mxu0 0.0
    %1926 = vmatprep.subr.mxu0 0.0
    %1927 = vmatpush2.msra.mxu0 0.0
    %1928 = vmatprep.subr.mxu0 0.0
    %1929 = vmatpush2.msra.mxu0 0.0
    %1930 = vmatprep.subr.mxu0 0.0
    %1931 = vmatpush2.msra.mxu0 0.0
    %1932 = vmatprep.subr.mxu0 0.0
    %1933 = vmatpush2.msra.mxu0 0.0
    %1934 = vmatprep.subr.mxu0 0.0
    %1935 = vmatpush2.msra.mxu0 0.0
    %1936 = vmatprep.subr.mxu0 0.0
    %1937 = vmatpush2.msra.mxu0 0.0
    %1938 = vmatprep.subr.mxu0 0.0
    %1939 = vmatpush2.msra.mxu0 0.0
    %1940 = vmatprep.subr.mxu0 0.0
    %1941 = vmatpush2.msra.mxu0 0.0
    %1942 = vmatprep.subr.mxu0 0.0
    %1943 = vmatpush2.msra.mxu0 0.0
    %1944 = vmatprep.subr.mxu0 0.0
    %1945 = vmatpush2.msra.mxu0 0.0
    %1946 = vmatprep.subr.mxu0 0.0
    %1947 = vmatpush2.msra.mxu0 0.0
    %1948 = vmatprep.subr.mxu0 0.0
    %1949 = vmatpush2.msra.mxu0 0.0
    %1950 = vmatprep.subr.mxu0 0.0
    %1951 = vmatpush2.msra.mxu0 0.0
    %1952 = vmatprep.mubr.f32.mxu0 0.0
    %v1953 = vand.u32 %v1762, 4294901760
    %1954 = vmatmul.mubr.f32.gmra.mxu0 %v1953
    %v1955 = vpop.f32.mrf.mxu0
    %v1956 = vadd.f32 %v1844, %v1955
    %v1957 = vpop.f32.mrf.mxu0
    %v1958 = vadd.f32 %v1846, %v1957
    %1959 = vdwg.mxu0
    %1960 = vmatprep.subr.mxu0 0.0
    %1961 = vmatpush1.msra.mxu0 0.0
    %1962 = vmatprep.subr.mxu0 0.0
    %1963 = vmatpush1.msra.mxu0 0.0
    %1964 = vmatprep.subr.mxu0 0.0
    %1965 = vmatpush1.msra.mxu0 0.0
    %1966 = vmatprep.subr.mxu0 0.0
    %1967 = vmatpush1.msra.mxu0 0.0
    %1968 = vmatprep.subr.mxu0 0.0
    %1969 = vmatpush1.msra.mxu0 0.0
    %1970 = vmatprep.subr.mxu0 0.0
    %1971 = vmatpush1.msra.mxu0 0.0
    %1972 = vmatprep.subr.mxu0 0.0
    %1973 = vmatpush1.msra.mxu0 0.0
    %1974 = vmatprep.subr.mxu0 0.0
    %1975 = vmatpush1.msra.mxu0 0.0
    %1976 = vmatprep.subr.mxu0 0.0
    %1977 = vmatpush1.msra.mxu0 0.0
    %1978 = vmatprep.subr.mxu0 0.0
    %1979 = vmatpush1.msra.mxu0 0.0
    %1980 = vmatprep.subr.mxu0 0.0
    %1981 = vmatpush1.msra.mxu0 0.0
    %1982 = vmatprep.subr.mxu0 0.0
    %1983 = vmatpush1.msra.mxu0 0.0
    %v1984 = vand.u32 %v1756, 4294901760
    %v1985 = vsub.f32 %v1756, %v1984
    %1986 = vmatprep.subr.mxu0 %v1985
    %v1987 = vand.u32 %v1755, 4294901760
    %v1988 = vsub.f32 %v1755, %v1987
    %1989 = vmatpush1.msra.mxu0 %v1988
    %v1990 = vand.u32 %v1754, 4294901760
    %v1991 = vsub.f32 %v1754, %v1990
    %1992 = vmatprep.subr.mxu0 %v1991
    %v1993 = vand.u32 %v1753, 4294901760
    %v1994 = vsub.f32 %v1753, %v1993
    %1995 = vmatpush1.msra.mxu0 %v1994
    %v1996 = vand.u32 %v1752, 4294901760
    %v1997 = vsub.f32 %v1752, %v1996
    %1998 = vmatprep.subr.mxu0 %v1997
    %v1999 = vand.u32 %v1751, 4294901760
    %v2000 = vsub.f32 %v1751, %v1999
    %2001 = vmatpush1.msra.mxu0 %v2000
    %v2002 = vand.u32 %v1750, 4294901760
    %v2003 = vsub.f32 %v1750, %v2002
    %2004 = vmatprep.subr.mxu0 %v2003
    %v2005 = vand.u32 %v1749, 4294901760
    %v2006 = vsub.f32 %v1749, %v2005
    %2007 = vmatpush1.msra.mxu0 %v2006
    %2008 = vmatprep.subr.mxu0 0.0
    %2009 = vmatpush2.msra.mxu0 0.0
    %2010 = vmatprep.subr.mxu0 0.0
    %2011 = vmatpush2.msra.mxu0 0.0
    %2012 = vmatprep.subr.mxu0 0.0
    %2013 = vmatpush2.msra.mxu0 0.0
    %2014 = vmatprep.subr.mxu0 0.0
    %2015 = vmatpush2.msra.mxu0 0.0
    %2016 = vmatprep.subr.mxu0 0.0
    %2017 = vmatpush2.msra.mxu0 0.0
    %2018 = vmatprep.subr.mxu0 0.0
    %2019 = vmatpush2.msra.mxu0 0.0
    %2020 = vmatprep.subr.mxu0 0.0
    %2021 = vmatpush2.msra.mxu0 0.0
    %2022 = vmatprep.subr.mxu0 0.0
    %2023 = vmatpush2.msra.mxu0 0.0
    %2024 = vmatprep.subr.mxu0 0.0
    %2025 = vmatpush2.msra.mxu0 0.0
    %2026 = vmatprep.subr.mxu0 0.0
    %2027 = vmatpush2.msra.mxu0 0.0
    %2028 = vmatprep.subr.mxu0 0.0
    %2029 = vmatpush2.msra.mxu0 0.0
    %2030 = vmatprep.subr.mxu0 0.0
    %2031 = vmatpush2.msra.mxu0 0.0
    %2032 = vmatprep.subr.mxu0 0.0
    %2033 = vmatpush2.msra.mxu0 0.0
    %2034 = vmatprep.subr.mxu0 0.0
    %2035 = vmatpush2.msra.mxu0 0.0
    %2036 = vmatprep.subr.mxu0 0.0
    %2037 = vmatpush2.msra.mxu0 0.0
    %2038 = vmatprep.subr.mxu0 0.0
    %2039 = vmatpush2.msra.mxu0 0.0
    %2040 = vmatprep.mubr.f32.mxu0 0.0
    %v2041 = vand.u32 %v1762, 4294901760
    %v2042 = vsub.f32 %v1762, %v2041
    %2043 = vmatmul.mubr.f32.gmra.mxu0 %v2042
    %v2044 = vpop.f32.mrf.mxu0
    %v2045 = vadd.f32 %v1956, %v2044
    %v2046 = vpop.f32.mrf.mxu0
    %v2047 = vadd.f32 %v1958, %v2046
    %2048 = vdwg.mxu0
    %2049 = vmatprep.subr.mxu0 0.0
    %2050 = vmatpush1.msra.mxu0 0.0
    %2051 = vmatprep.subr.mxu0 0.0
    %2052 = vmatpush1.msra.mxu0 0.0
    %2053 = vmatprep.subr.mxu0 0.0
    %2054 = vmatpush1.msra.mxu0 0.0
    %2055 = vmatprep.subr.mxu0 0.0
    %2056 = vmatpush1.msra.mxu0 0.0
    %2057 = vmatprep.subr.mxu0 0.0
    %2058 = vmatpush1.msra.mxu0 0.0
    %2059 = vmatprep.subr.mxu0 0.0
    %2060 = vmatpush1.msra.mxu0 0.0
    %2061 = vmatprep.subr.mxu0 0.0
    %2062 = vmatpush1.msra.mxu0 0.0
    %2063 = vmatprep.subr.mxu0 0.0
    %2064 = vmatpush1.msra.mxu0 0.0
    %2065 = vmatprep.subr.mxu0 0.0
    %2066 = vmatpush1.msra.mxu0 0.0
    %2067 = vmatprep.subr.mxu0 0.0
    %2068 = vmatpush1.msra.mxu0 0.0
    %2069 = vmatprep.subr.mxu0 0.0
    %2070 = vmatpush1.msra.mxu0 0.0
    %2071 = vmatprep.subr.mxu0 0.0
    %2072 = vmatpush1.msra.mxu0 0.0
    %v2073 = vand.u32 %v1756, 4294901760
    %2074 = vmatprep.subr.mxu0 %v2073
    %v2075 = vand.u32 %v1755, 4294901760
    %2076 = vmatpush1.msra.mxu0 %v2075
    %v2077 = vand.u32 %v1754, 4294901760
    %2078 = vmatprep.subr.mxu0 %v2077
    %v2079 = vand.u32 %v1753, 4294901760
    %2080 = vmatpush1.msra.mxu0 %v2079
    %v2081 = vand.u32 %v1752, 4294901760
    %2082 = vmatprep.subr.mxu0 %v2081
    %v2083 = vand.u32 %v1751, 4294901760
    %2084 = vmatpush1.msra.mxu0 %v2083
    %v2085 = vand.u32 %v1750, 4294901760
    %2086 = vmatprep.subr.mxu0 %v2085
    %v2087 = vand.u32 %v1749, 4294901760
    %2088 = vmatpush1.msra.mxu0 %v2087
    %2089 = vmatprep.subr.mxu0 0.0
    %2090 = vmatpush2.msra.mxu0 0.0
    %2091 = vmatprep.subr.mxu0 0.0
    %2092 = vmatpush2.msra.mxu0 0.0
    %2093 = vmatprep.subr.mxu0 0.0
    %2094 = vmatpush2.msra.mxu0 0.0
    %2095 = vmatprep.subr.mxu0 0.0
    %2096 = vmatpush2.msra.mxu0 0.0
    %2097 = vmatprep.subr.mxu0 0.0
    %2098 = vmatpush2.msra.mxu0 0.0
    %2099 = vmatprep.subr.mxu0 0.0
    %2100 = vmatpush2.msra.mxu0 0.0
    %2101 = vmatprep.subr.mxu0 0.0
    %2102 = vmatpush2.msra.mxu0 0.0
    %2103 = vmatprep.subr.mxu0 0.0
    %2104 = vmatpush2.msra.mxu0 0.0
    %2105 = vmatprep.subr.mxu0 0.0
    %2106 = vmatpush2.msra.mxu0 0.0
    %2107 = vmatprep.subr.mxu0 0.0
    %2108 = vmatpush2.msra.mxu0 0.0
    %2109 = vmatprep.subr.mxu0 0.0
    %2110 = vmatpush2.msra.mxu0 0.0
    %2111 = vmatprep.subr.mxu0 0.0
    %2112 = vmatpush2.msra.mxu0 0.0
    %2113 = vmatprep.subr.mxu0 0.0
    %2114 = vmatpush2.msra.mxu0 0.0
    %2115 = vmatprep.subr.mxu0 0.0
    %2116 = vmatpush2.msra.mxu0 0.0
    %2117 = vmatprep.subr.mxu0 0.0
    %2118 = vmatpush2.msra.mxu0 0.0
    %2119 = vmatprep.subr.mxu0 0.0
    %2120 = vmatpush2.msra.mxu0 0.0
    %2121 = vmatprep.mubr.f32.mxu0 0.0
    %v2122 = vand.u32 %v1762, 4294901760
    %v2123 = vsub.f32 %v1762, %v2122
    %v2124 = vand.u32 %v2123, 4294901760
    %2125 = vmatmul.mubr.f32.gmra.mxu0 %v2124
    %v2126 = vpop.f32.mrf.mxu0
    %v2127 = vadd.f32 %v2045, %v2126
    %v2128 = vpop.f32.mrf.mxu0
    %v2129 = vadd.f32 %v2047, %v2128
    %2130 = vdwg.mxu0
    %2131 = vmatprep.subr.mxu0 0.0
    %2132 = vmatpush1.msra.mxu0 0.0
    %2133 = vmatprep.subr.mxu0 0.0
    %2134 = vmatpush1.msra.mxu0 0.0
    %2135 = vmatprep.subr.mxu0 0.0
    %2136 = vmatpush1.msra.mxu0 0.0
    %2137 = vmatprep.subr.mxu0 0.0
    %2138 = vmatpush1.msra.mxu0 0.0
    %2139 = vmatprep.subr.mxu0 0.0
    %2140 = vmatpush1.msra.mxu0 0.0
    %2141 = vmatprep.subr.mxu0 0.0
    %2142 = vmatpush1.msra.mxu0 0.0
    %2143 = vmatprep.subr.mxu0 0.0
    %2144 = vmatpush1.msra.mxu0 0.0
    %2145 = vmatprep.subr.mxu0 0.0
    %2146 = vmatpush1.msra.mxu0 0.0
    %2147 = vmatprep.subr.mxu0 0.0
    %2148 = vmatpush1.msra.mxu0 0.0
    %2149 = vmatprep.subr.mxu0 0.0
    %2150 = vmatpush1.msra.mxu0 0.0
    %2151 = vmatprep.subr.mxu0 0.0
    %2152 = vmatpush1.msra.mxu0 0.0
    %2153 = vmatprep.subr.mxu0 0.0
    %2154 = vmatpush1.msra.mxu0 0.0
    %v2155 = vand.u32 %v1756, 4294901760
    %v2156 = vsub.f32 %v1756, %v2155
    %v2157 = vand.u32 %v2156, 4294901760
    %2158 = vmatprep.subr.mxu0 %v2157
    %v2159 = vand.u32 %v1755, 4294901760
    %v2160 = vsub.f32 %v1755, %v2159
    %v2161 = vand.u32 %v2160, 4294901760
    %2162 = vmatpush1.msra.mxu0 %v2161
    %v2163 = vand.u32 %v1754, 4294901760
    %v2164 = vsub.f32 %v1754, %v2163
    %v2165 = vand.u32 %v2164, 4294901760
    %2166 = vmatprep.subr.mxu0 %v2165
    %v2167 = vand.u32 %v1753, 4294901760
    %v2168 = vsub.f32 %v1753, %v2167
    %v2169 = vand.u32 %v2168, 4294901760
    %2170 = vmatpush1.msra.mxu0 %v2169
    %v2171 = vand.u32 %v1752, 4294901760
    %v2172 = vsub.f32 %v1752, %v2171
    %v2173 = vand.u32 %v2172, 4294901760
    %2174 = vmatprep.subr.mxu0 %v2173
    %v2175 = vand.u32 %v1751, 4294901760
    %v2176 = vsub.f32 %v1751, %v2175
    %v2177 = vand.u32 %v2176, 4294901760
    %2178 = vmatpush1.msra.mxu0 %v2177
    %v2179 = vand.u32 %v1750, 4294901760
    %v2180 = vsub.f32 %v1750, %v2179
    %v2181 = vand.u32 %v2180, 4294901760
    %2182 = vmatprep.subr.mxu0 %v2181
    %v2183 = vand.u32 %v1749, 4294901760
    %v2184 = vsub.f32 %v1749, %v2183
    %v2185 = vand.u32 %v2184, 4294901760
    %2186 = vmatpush1.msra.mxu0 %v2185
    %2187 = vmatprep.subr.mxu0 0.0
    %2188 = vmatpush2.msra.mxu0 0.0
    %2189 = vmatprep.subr.mxu0 0.0
    %2190 = vmatpush2.msra.mxu0 0.0
    %2191 = vmatprep.subr.mxu0 0.0
    %2192 = vmatpush2.msra.mxu0 0.0
    %2193 = vmatprep.subr.mxu0 0.0
    %2194 = vmatpush2.msra.mxu0 0.0
    %2195 = vmatprep.subr.mxu0 0.0
    %2196 = vmatpush2.msra.mxu0 0.0
    %2197 = vmatprep.subr.mxu0 0.0
    %2198 = vmatpush2.msra.mxu0 0.0
    %2199 = vmatprep.subr.mxu0 0.0
    %2200 = vmatpush2.msra.mxu0 0.0
    %2201 = vmatprep.subr.mxu0 0.0
    %2202 = vmatpush2.msra.mxu0 0.0
    %2203 = vmatprep.subr.mxu0 0.0
    %2204 = vmatpush2.msra.mxu0 0.0
    %2205 = vmatprep.subr.mxu0 0.0
    %2206 = vmatpush2.msra.mxu0 0.0
    %2207 = vmatprep.subr.mxu0 0.0
    %2208 = vmatpush2.msra.mxu0 0.0
    %2209 = vmatprep.subr.mxu0 0.0
    %2210 = vmatpush2.msra.mxu0 0.0
    %2211 = vmatprep.subr.mxu0 0.0
    %2212 = vmatpush2.msra.mxu0 0.0
    %2213 = vmatprep.subr.mxu0 0.0
    %2214 = vmatpush2.msra.mxu0 0.0
    %2215 = vmatprep.subr.mxu0 0.0
    %2216 = vmatpush2.msra.mxu0 0.0
    %2217 = vmatprep.subr.mxu0 0.0
    %2218 = vmatpush2.msra.mxu0 0.0
    %2219 = vmatprep.mubr.f32.mxu0 0.0
    %v2220 = vand.u32 %v1762, 4294901760
    %2221 = vmatmul.mubr.f32.gmra.mxu0 %v2220
    %v2222 = vpop.f32.mrf.mxu0
    %v2223 = vadd.f32 %v2127, %v2222
    %v2224 = vpop.f32.mrf.mxu0
    %v2225 = vadd.f32 %v2129, %v2224
    %2226 = vdwg.mxu0
    %2227 = vmatprep.subr.mxu0 0.0
    %2228 = vmatpush1.msra.mxu0 0.0
    %2229 = vmatprep.subr.mxu0 0.0
    %2230 = vmatpush1.msra.mxu0 0.0
    %2231 = vmatprep.subr.mxu0 0.0
    %2232 = vmatpush1.msra.mxu0 0.0
    %2233 = vmatprep.subr.mxu0 0.0
    %2234 = vmatpush1.msra.mxu0 0.0
    %2235 = vmatprep.subr.mxu0 0.0
    %2236 = vmatpush1.msra.mxu0 0.0
    %2237 = vmatprep.subr.mxu0 0.0
    %2238 = vmatpush1.msra.mxu0 0.0
    %2239 = vmatprep.subr.mxu0 0.0
    %2240 = vmatpush1.msra.mxu0 0.0
    %2241 = vmatprep.subr.mxu0 0.0
    %2242 = vmatpush1.msra.mxu0 0.0
    %2243 = vmatprep.subr.mxu0 0.0
    %2244 = vmatpush1.msra.mxu0 0.0
    %2245 = vmatprep.subr.mxu0 0.0
    %2246 = vmatpush1.msra.mxu0 0.0
    %2247 = vmatprep.subr.mxu0 0.0
    %2248 = vmatpush1.msra.mxu0 0.0
    %2249 = vmatprep.subr.mxu0 0.0
    %2250 = vmatpush1.msra.mxu0 0.0
    %v2251 = vand.u32 %v1756, 4294901760
    %2252 = vmatprep.subr.mxu0 %v2251
    %v2253 = vand.u32 %v1755, 4294901760
    %2254 = vmatpush1.msra.mxu0 %v2253
    %v2255 = vand.u32 %v1754, 4294901760
    %2256 = vmatprep.subr.mxu0 %v2255
    %v2257 = vand.u32 %v1753, 4294901760
    %2258 = vmatpush1.msra.mxu0 %v2257
    %v2259 = vand.u32 %v1752, 4294901760
    %2260 = vmatprep.subr.mxu0 %v2259
    %v2261 = vand.u32 %v1751, 4294901760
    %2262 = vmatpush1.msra.mxu0 %v2261
    %v2263 = vand.u32 %v1750, 4294901760
    %2264 = vmatprep.subr.mxu0 %v2263
    %v2265 = vand.u32 %v1749, 4294901760
    %2266 = vmatpush1.msra.mxu0 %v2265
    %2267 = vmatprep.subr.mxu0 0.0
    %2268 = vmatpush2.msra.mxu0 0.0
    %2269 = vmatprep.subr.mxu0 0.0
    %2270 = vmatpush2.msra.mxu0 0.0
    %2271 = vmatprep.subr.mxu0 0.0
    %2272 = vmatpush2.msra.mxu0 0.0
    %2273 = vmatprep.subr.mxu0 0.0
    %2274 = vmatpush2.msra.mxu0 0.0
    %2275 = vmatprep.subr.mxu0 0.0
    %2276 = vmatpush2.msra.mxu0 0.0
    %2277 = vmatprep.subr.mxu0 0.0
    %2278 = vmatpush2.msra.mxu0 0.0
    %2279 = vmatprep.subr.mxu0 0.0
    %2280 = vmatpush2.msra.mxu0 0.0
    %2281 = vmatprep.subr.mxu0 0.0
    %2282 = vmatpush2.msra.mxu0 0.0
    %2283 = vmatprep.subr.mxu0 0.0
    %2284 = vmatpush2.msra.mxu0 0.0
    %2285 = vmatprep.subr.mxu0 0.0
    %2286 = vmatpush2.msra.mxu0 0.0
    %2287 = vmatprep.subr.mxu0 0.0
    %2288 = vmatpush2.msra.mxu0 0.0
    %2289 = vmatprep.subr.mxu0 0.0
    %2290 = vmatpush2.msra.mxu0 0.0
    %2291 = vmatprep.subr.mxu0 0.0
    %2292 = vmatpush2.msra.mxu0 0.0
    %2293 = vmatprep.subr.mxu0 0.0
    %2294 = vmatpush2.msra.mxu0 0.0
    %2295 = vmatprep.subr.mxu0 0.0
    %2296 = vmatpush2.msra.mxu0 0.0
    %2297 = vmatprep.subr.mxu0 0.0
    %2298 = vmatpush2.msra.mxu0 0.0
    %2299 = vmatprep.mubr.f32.mxu0 0.0
    %v2300 = vand.u32 %v1762, 4294901760
    %2301 = vmatmul.mubr.f32.gmra.mxu0 %v2300
    %v2302 = vpop.f32.mrf.mxu0
    %v2303 = vadd.f32 %v2223, %v2302
    %v2304 = vpop.f32.mrf.mxu0
    %v2305 = vadd.f32 %v2225, %v2304
    %2306 = vdwg.mxu0
    %v2307 = vadd.f32 %v32, %v2303
    %v2308 = vadd.f32 %v33, %v2305
    %2309 = vst [vmem:[#allocation5] sm:$0xff] %v2307
    %2310 = vst [vmem:[#allocation5 + $0x8] sm:$0xff] %v2308
    // Predicated region
    $region22: #{tpu_custom_call.1} parent=1 // pred_check
      _
    $region23: #{tpu_custom_call.1} parent=1 // pred_check_branch
      %2312 = sbr.rel (0) target = $region25
    $region24: #{tpu_custom_call.1} parent=1 // pred_region
      %s2314 = ssub.s32 256, 256
      %2315 = vsyncadd [#allocation4], %s2314
      %s2317 = sshll.u32 [#allocation5], 4
      %s2318 = int_to_ptr.vmem [resolvable:$true] %s2317
      %2320 = dma.vmem_to_hbm [thread:$0]  %s2318, 256, %s4, [#allocation4]
    $region25: #{tpu_custom_call.1} parent=1 // pred_fallthru
      _
    // Predicated region
    $region26: #{tpu_custom_call.1} parent=1 // pred_check
      _
    $region27: #{tpu_custom_call.1} parent=1 // pred_check_branch
      %2322 = sbr.rel (0) target = $region29
    $region28: #{tpu_custom_call.1} parent=1 // pred_region
      %2323 = dma.done [#allocation4], 256
    $region29: #{tpu_custom_call.1} parent=1 // pred_fallthru
      _
    %2324 = vsyncpa [#allocation3], 1
    %2325 = vsyncpa [#allocation4], 1

</llo_original>
